<compile_context>
chip_gen: v5e
topology: v5e:2x2
jax: 0.10.0
libtpu: 0.0.40
codegen_flags: <defaults>
</compile_context>

<pallas_src>
import functools

import jax
import jax.numpy as jnp
from jax.experimental import pallas as pl
from jax.experimental.pallas import tpu as pltpu

# --- model hyper-parameters (from CNN.__init__) ---
VOCAB = 17
EMB = 5              # self.emb_size (embed=True branch)
NUM_K = 128          # self.num_k
K_SIZE = 22          # self.k_size
CONV_STRIDE = 2
POOL_K = 100         # self.m_p_size_1
POOL_S = 4
FC_HIDDEN = 500      # self.fc_hidden_size

CK = EMB * K_SIZE            # 110 (real contraction dim)
CK_PAD = 128                 # lane-aligned contraction dim
FC_HIDDEN_PAD = 512          # lane-aligned hidden dim
OUT_PAD = 128                # lane-aligned output dim
NEG_BIG = -1e30              # bias for padded logit lanes (masked in softmax)


def conv_layer_size(l_in, k, stride, padding=0, dilation=1):
    return int((l_in + 2 * padding - dilation * (k - 1) - 1) / stride + 1)


def _round_up(x, m):
    return ((x + m - 1) // m) * m


# ----------------------------- fused kernel --------------------------------


def cnn_fused_kernel(xcol_ref, wc_ref, bc_ref, w1_hbm, b1_ref, w2_ref, b2_ref,
                     out_ref, w1_vmem, w1_sem, *, lc_pad, lp, out_size):
    """conv(as matmul) + ReLU + MaxPool1d + fc + ReLU + out_layer + softmax.

    xcol_ref: (BB*lc_pad, CK_PAD) bf16     wc_ref : (CK_PAD, NUM_K) bf16
    bc_ref  : (1, NUM_K) f32               w1_hbm : (lp, NUM_K, FC_HIDDEN_PAD) bf16 (HBM)
    b1_ref  : (1, FC_HIDDEN_PAD) f32       w2_ref : (FC_HIDDEN_PAD, OUT_PAD) bf16
    b2_ref  : (1, OUT_PAD) f32             out_ref: (BB, OUT_PAD) f32
    w1_vmem : VMEM scratch matching w1_hbm; w1_sem: DMA semaphore
    """
    bb = out_ref.shape[0]

    # Kick off the w1 DMA (largest input) so it overlaps with conv + pooling;
    # we only wait right before the FC1 dots.  (For num_blocks > 1 each grid
    # step re-fetches w1; the copy stays hidden behind compute and each v7x
    # core needs its own copy anyway.)
    w1_copy = pltpu.make_async_copy(w1_hbm, w1_vmem, w1_sem)
    w1_copy.start()

    # --- Conv1d as one batch-collapsed MXU matmul + bias + ReLU (f32) ---
    y = jnp.dot(xcol_ref[...], wc_ref[...], preferred_element_type=jnp.float32)
    y = jnp.maximum(y + bc_ref[...], 0.0)            # (BB*lc_pad, NUM_K)

    # --- MaxPool1d(POOL_K, stride=POOL_S) via a log-tree of shifted maxima ---
    # After the tree, w[r] = max(y[r : r+POOL_K]).  Only full-width slices,
    # concats with zeros and elementwise maxes -- no misaligned window slices,
    # no lane-axis concatenation.
    def shifted(a, k):        # a[r + k]; the last k rows are unused filler
        return jnp.concatenate(
            [a[k:, :], jnp.zeros((k, a.shape[1]), a.dtype)], axis=0)

    w = y
    span = 1
    while span * 2 <= POOL_K:
        w = jnp.maximum(w, shifted(w, span))
        span *= 2
    if span < POOL_K:
        w = jnp.maximum(w, shifted(w, POOL_K - span))
    # Rows consumed below (b*lc_pad + p*POOL_S with (lp-1)*POOL_S+POOL_K <= lc)
    # never touch padded / filler rows.
    wp = w.reshape(bb, lc_pad, NUM_K)                # tile-aligned reshape

    # --- FC1 accumulated over the lp pool positions (no flatten anywhere) ---
    w1_copy.wait()                                   # w1 now resident in VMEM
    h = jnp.zeros((bb, FC_HIDDEN_PAD), jnp.float32)
    for p in range(lp):                              # lp is small & static
        pooled_p = wp[:, p * POOL_S, :].astype(jnp.bfloat16)   # (bb, NUM_K)
        h = h + jnp.dot(pooled_p, w1_vmem[p],
                        preferred_element_type=jnp.float32)
    h = jnp.maximum(h + b1_ref[...], 0.0)

    # --- output head + softmax / sigmoid over a lane-dense (bb, OUT_PAD) block
    o = jnp.dot(h.astype(jnp.bfloat16), w2_ref[...],
                preferred_element_type=jnp.float32) + b2_ref[...]
    if out_size != 1:
        m = jnp.max(o, axis=-1, keepdims=True)
        e = jnp.exp(o - m)                           # padded lanes -> exp(-1e30)=0
        out_ref[...] = e * pl.reciprocal(jnp.sum(e, axis=-1, keepdims=True),
                                         approx=True)
    else:
        out_ref[...] = 1.0 / (1.0 + jnp.exp(-o))


# ----------------------------- params ---------------------------------------


def init_params(seq_len, out_size, key):
    """PyTorch-layout parameters (same layout as the nn.Module)."""
    lc = conv_layer_size(seq_len, K_SIZE, CONV_STRIDE)
    lp = conv_layer_size(lc, POOL_K, POOL_S)
    fc_in = NUM_K * lp
    ks = jax.random.split(key, 7)
    return {
        "emb":    jax.random.normal(ks[0], (VOCAB, EMB), jnp.float32) * 0.1,
        "conv_w": jax.random.normal(ks[1], (NUM_K, EMB, K_SIZE), jnp.float32) * 0.05,
        "conv_b": jax.random.normal(ks[2], (NUM_K,), jnp.float32) * 0.01,
        "fc_w":   jax.random.normal(ks[3], (FC_HIDDEN, fc_in), jnp.float32) * 0.02,
        "fc_b":   jax.random.normal(ks[4], (FC_HIDDEN,), jnp.float32) * 0.01,
        "out_w":  jax.random.normal(ks[5], (out_size, FC_HIDDEN), jnp.float32) * 0.05,
        "out_b":  jax.random.normal(ks[6], (out_size,), jnp.float32) * 0.01,
    }


def prepare_params(params, seq_len, out_size):
    """One-time conversion to kernel-ready tensors: pre-permuted, zero-padded
    to lane-aligned shapes, matmul operands cast to bf16."""
    lc = conv_layer_size(seq_len, K_SIZE, CONV_STRIDE)
    lp = conv_layer_size(lc, POOL_K, POOL_S)
    assert lp >= 1, "seq_len too small: max-pool output is empty"
    assert (lp - 1) * POOL_S + POOL_K <= lc, "pool window would read padded rows"

    # Conv: (NUM_K, E, K) -> rows in K-major (k*E + e) order to match the
    # K-major im2col built in the wrapper; pad contraction 110 -> 128.
    wc = params["conv_w"].transpose(2, 1, 0).reshape(CK, NUM_K)
    wc = jnp.pad(wc, ((0, CK_PAD - CK), (0, 0))).astype(jnp.bfloat16)
    bc = params["conv_b"].reshape(1, NUM_K).astype(jnp.float32)

    # FC1: fc_w is (FC_HIDDEN, NUM_K*lp) with torch's channel-major flatten
    # (c*lp + p).  Reshape to (lp, NUM_K, FC_HIDDEN_PAD) so the kernel can
    # accumulate h += pooled_p @ w1[p] without ever flattening activations.
    w1 = params["fc_w"].T.reshape(NUM_K, lp, FC_HIDDEN).transpose(1, 0, 2)
    w1 = jnp.pad(w1, ((0, 0), (0, 0), (0, FC_HIDDEN_PAD - FC_HIDDEN)))
    w1 = w1.astype(jnp.bfloat16)
    b1 = jnp.pad(params["fc_b"], (0, FC_HIDDEN_PAD - FC_HIDDEN))
    b1 = b1.reshape(1, FC_HIDDEN_PAD).astype(jnp.float32)

    # Head: (out, hidden) -> (hidden_pad, OUT_PAD); padded rows/cols are zero.
    w2 = jnp.pad(params["out_w"].T,
                 ((0, FC_HIDDEN_PAD - FC_HIDDEN), (0, OUT_PAD - out_size)))
    w2 = w2.astype(jnp.bfloat16)
    # Padded logit lanes carry a -1e30 bias so the lane-dense softmax ignores them.
    b2 = jnp.full((OUT_PAD,), NEG_BIG, jnp.float32)
    b2 = b2.at[:out_size].set(params["out_b"].astype(jnp.float32))
    b2 = b2.reshape(1, OUT_PAD)

    return {"emb": params["emb"], "wc": wc, "bc": bc,
            "w1": w1, "b1": b1, "w2": w2, "b2": b2}


# ----------------------------- forward --------------------------------------


@functools.partial(jax.jit, static_argnums=(2, 3))
def cnn_forward(tokens, prep, out_size, num_blocks):
    B, L = tokens.shape
    assert B % num_blocks == 0
    bb = B // num_blocks
    lc = conv_layer_size(L, K_SIZE, CONV_STRIDE)
    lp = conv_layer_size(lc, POOL_K, POOL_S)
    assert lp >= 1
    assert (lp - 1) * POOL_S + POOL_K <= lc      # pool never reads padded rows
    lc_pad = _round_up(lc, 8)                    # 8-aligned rows per sample

    # --- glue: one token-window gather + one embedding lookup (K-major im2col)
    # TODO(synk): the token gather + embedding lookup could be moved in-kernel
    # via scalar-prefetched tokens; left as a single XLA gather (tiny).
    idx = jnp.arange(lc)[:, None] * CONV_STRIDE + jnp.arange(K_SIZE)[None, :]
    win_tok = tokens[:, idx]                                   # (B, lc, K)
    xcol = prep["emb"][win_tok].reshape(B, lc, CK)             # (B, lc, K*E)
    xcol = jnp.pad(xcol, ((0, 0), (0, lc_pad - lc), (0, CK_PAD - CK)))
    xcol = xcol.reshape(num_blocks, bb * lc_pad, CK_PAD).astype(jnp.bfloat16)

    # --- single fused kernel over a "parallel" batch-block grid axis ---
    out = pl.pallas_call(
        functools.partial(cnn_fused_kernel, lc_pad=lc_pad, lp=lp,
                          out_size=out_size),
        out_shape=jax.ShapeDtypeStruct((num_blocks, bb, OUT_PAD), jnp.float32),
        grid=(num_blocks,),
        in_specs=[
            pl.BlockSpec((None, bb * lc_pad, CK_PAD), lambda i: (i, 0, 0)),
            pl.BlockSpec((CK_PAD, NUM_K), lambda i: (0, 0)),
            pl.BlockSpec((1, NUM_K), lambda i: (0, 0)),
            pl.BlockSpec(memory_space=pl.ANY),   # w1 stays in HBM; DMA'd in-kernel
            pl.BlockSpec((1, FC_HIDDEN_PAD), lambda i: (0, 0)),
            pl.BlockSpec((FC_HIDDEN_PAD, OUT_PAD), lambda i: (0, 0)),
            pl.BlockSpec((1, OUT_PAD), lambda i: (0, 0)),
        ],
        out_specs=pl.BlockSpec((None, bb, OUT_PAD), lambda i: (i, 0, 0)),
        scratch_shapes=[
            pltpu.VMEM((lp, NUM_K, FC_HIDDEN_PAD), jnp.bfloat16),
            pltpu.SemaphoreType.DMA,
        ],
        compiler_params=pltpu.CompilerParams(
            dimension_semantics=("parallel",)),  # v7x: both TCs when num_blocks>1
    )(xcol, prep["wc"], prep["bc"], prep["w1"], prep["b1"], prep["w2"], prep["b2"])

    return out.reshape(B, OUT_PAD)[:, :out_size]


# ----------------------------- pure-JAX reference ----------------------------


def cnn_reference(tokens, params, out_size):
    """f32 reference matching the PyTorch forward (for correctness check)."""
    B, L = tokens.shape
    lc = conv_layer_size(L, K_SIZE, CONV_STRIDE)
    lp = conv_layer_size(lc, POOL_K, POOL_S)
    emb = params["emb"][tokens]                                # (B, L, E)
    idx = jnp.arange(lc)[:, None] * CONV_STRIDE + jnp.arange(K_SIZE)[None, :]
    win = emb[:, idx, :]                                       # (B, lc, K, E)
    y = jnp.einsum("blke,cek->bcl", win, params["conv_w"])
    y = jnp.maximum(y + params["conv_b"][None, :, None], 0.0)  # (B, C, lc)
    pooled = jnp.stack(
        [jnp.max(y[:, :, p * POOL_S: p * POOL_S + POOL_K], axis=-1)
         for p in range(lp)], axis=-1)                         # (B, C, lp)
    flat = pooled.reshape(B, -1)                               # channel-major
    h = jnp.maximum(flat @ params["fc_w"].T + params["fc_b"], 0.0)
    o = h @ params["out_w"].T + params["out_b"]
    return jax.nn.softmax(o, axis=-1) if out_size != 1 else jax.nn.sigmoid(o)


if __name__ == "__main__":
    # seq_len must be >= 2*(POOL_K-1)+K_SIZE = 220 for the pool to be non-empty.
    BATCH = 2
    SEQ_LEN = 256      # len_conv = 118, len_pool = 5, fc_in = 640
    OUT_SIZE = 4       # != 1 -> softmax output head

    key = jax.random.PRNGKey(0)
    pkey, tkey = jax.random.split(key)
    params = init_params(SEQ_LEN, OUT_SIZE, pkey)
    prep = prepare_params(params, SEQ_LEN, OUT_SIZE)      # one-time weight prep
    tokens = jax.random.randint(tkey, (BATCH, SEQ_LEN), 0, VOCAB, dtype=jnp.int32)

    # num_blocks=1: whole batch in one grid step (v5e/v6e).  On v7x, pass
    # num_blocks=2 so each TensorCore runs the fused pipeline on half the batch.
    out = cnn_forward(tokens, prep, OUT_SIZE, 1)
    jax.block_until_ready(out)

    ref = cnn_reference(tokens, params, OUT_SIZE)
    assert out.shape == (BATCH, OUT_SIZE)
    assert bool(jnp.all(jnp.isfinite(out)))
    # softmax rows sum to ~1 (approx reciprocal in the kernel)
    assert bool(jnp.allclose(jnp.sum(out, axis=-1), 1.0, atol=5e-3))
    # matches the f32 reference to bf16-matmul tolerance
    err = float(jnp.max(jnp.abs(out - ref)))
    assert err < 2e-2, f"kernel/reference mismatch: max abs err {err}"
    print("KERNEL_OK")
</pallas_src>

<mosaic_0001>
module attributes {stable_mosaic.version = 11 : i64} {
  func.func @cnn_fused_kernel(%arg0: i32, %arg1: memref<1x240x128xbf16, #tpu.memory_space<vmem>>, %arg2: memref<128x128xbf16, #tpu.memory_space<vmem>>, %arg3: memref<1x128xf32, #tpu.memory_space<vmem>>, %arg4: memref<5x128x512xbf16, #tpu.memory_space<any>>, %arg5: memref<1x512xf32, #tpu.memory_space<vmem>>, %arg6: memref<512x128xbf16, #tpu.memory_space<vmem>>, %arg7: memref<1x128xf32, #tpu.memory_space<vmem>>, %arg8: memref<1x2x128xf32, #tpu.memory_space<vmem>>, %arg9: memref<5x128x512xbf16, #tpu.memory_space<vmem>>, %arg10: memref<!tpu.dma_semaphore, #tpu.memory_space<semaphore_mem>>) attributes {dimension_semantics = [#tpu.dimension_semantics<parallel>], iteration_bounds = array<i64: 1>, scalar_prefetch = 0 : i64, scratch_operands = 2 : i64, tpu.core_type = #tpu.core_type<tc>, window_params = [{transform_indices = @transform_0, window_bounds = array<i64: 1, 240, 128>}, {pipeline_mode = #tpu.pipeline_mode<synchronous>, transform_indices = @transform_1, window_bounds = array<i64: 128, 128>}, {pipeline_mode = #tpu.pipeline_mode<synchronous>, transform_indices = @transform_2, window_bounds = array<i64: 1, 128>}, {}, {pipeline_mode = #tpu.pipeline_mode<synchronous>, transform_indices = @transform_4, window_bounds = array<i64: 1, 512>}, {pipeline_mode = #tpu.pipeline_mode<synchronous>, transform_indices = @transform_5, window_bounds = array<i64: 512, 128>}, {pipeline_mode = #tpu.pipeline_mode<synchronous>, transform_indices = @transform_6, window_bounds = array<i64: 1, 128>}, {transform_indices = @transform_7, window_bounds = array<i64: 1, 2, 128>}]} {
    tpu.enqueue_dma source(%arg4 : memref<5x128x512xbf16, #tpu.memory_space<any>>) target(%arg9 : memref<5x128x512xbf16, #tpu.memory_space<vmem>>) target_semaphore(%arg10 : memref<!tpu.dma_semaphore, #tpu.memory_space<semaphore_mem>>)
    %c0 = arith.constant 0 : index
    %c0_0 = arith.constant 0 : index
    %c0_1 = arith.constant 0 : index
    %0 = vector.load %arg1[%c0, %c0_0, %c0_1] : memref<1x240x128xbf16, #tpu.memory_space<vmem>>, vector<1x240x128xbf16>
    %1 = vector.shape_cast %0 : vector<1x240x128xbf16> to vector<240x128xbf16>
    %c0_2 = arith.constant 0 : index
    %c0_3 = arith.constant 0 : index
    %2 = vector.load %arg2[%c0_2, %c0_3] : memref<128x128xbf16, #tpu.memory_space<vmem>>, vector<128x128xbf16>
    %cst = arith.constant dense<0.000000e+00> : vector<240x128xf32>
    %3 = tpu.matmul %1, %2, %cst {dimension_numbers = #tpu.dot_dimension_numbers<[1], [0], [0], [1], [0, 0, 1, 1], [], []>} : vector<240x128xbf16>, vector<128x128xbf16>, vector<240x128xf32> -> vector<240x128xf32>
    %c0_4 = arith.constant 0 : index
    %c0_5 = arith.constant 0 : index
    %4 = vector.load %arg3[%c0_4, %c0_5] : memref<1x128xf32, #tpu.memory_space<vmem>>, vector<1x128xf32>
    %5 = vector.broadcast %4 : vector<1x128xf32> to vector<240x128xf32>
    %6 = arith.addf %3, %5 : vector<240x128xf32>
    %cst_6 = arith.constant 0.000000e+00 : f32
    %7 = vector.broadcast %cst_6 : f32 to vector<240x128xf32>
    %8 = arith.maximumf %6, %7 : vector<240x128xf32>
    %9 = vector.extract_strided_slice %8 {offsets = [1, 0], sizes = [239, 128], strides = [1, 1]} : vector<240x128xf32> to vector<239x128xf32>
    %cst_7 = arith.constant 0.000000e+00 : f32
    %10 = vector.broadcast %cst_7 : f32 to vector<1x128xf32>
    %11 = tpu.concatenate %9, %10 in 0 : vector<239x128xf32>, vector<1x128xf32> -> vector<240x128xf32>
    %12 = arith.maximumf %8, %11 : vector<240x128xf32>
    %13 = vector.extract_strided_slice %12 {offsets = [2, 0], sizes = [238, 128], strides = [1, 1]} : vector<240x128xf32> to vector<238x128xf32>
    %cst_8 = arith.constant 0.000000e+00 : f32
    %14 = vector.broadcast %cst_8 : f32 to vector<2x128xf32>
    %15 = tpu.concatenate %13, %14 in 0 : vector<238x128xf32>, vector<2x128xf32> -> vector<240x128xf32>
    %16 = arith.maximumf %12, %15 : vector<240x128xf32>
    %17 = vector.extract_strided_slice %16 {offsets = [4, 0], sizes = [236, 128], strides = [1, 1]} : vector<240x128xf32> to vector<236x128xf32>
    %cst_9 = arith.constant 0.000000e+00 : f32
    %18 = vector.broadcast %cst_9 : f32 to vector<4x128xf32>
    %19 = tpu.concatenate %17, %18 in 0 : vector<236x128xf32>, vector<4x128xf32> -> vector<240x128xf32>
    %20 = arith.maximumf %16, %19 : vector<240x128xf32>
    %21 = vector.extract_strided_slice %20 {offsets = [8, 0], sizes = [232, 128], strides = [1, 1]} : vector<240x128xf32> to vector<232x128xf32>
    %cst_10 = arith.constant 0.000000e+00 : f32
    %22 = vector.broadcast %cst_10 : f32 to vector<8x128xf32>
    %23 = tpu.concatenate %21, %22 in 0 : vector<232x128xf32>, vector<8x128xf32> -> vector<240x128xf32>
    %24 = arith.maximumf %20, %23 : vector<240x128xf32>
    %25 = vector.extract_strided_slice %24 {offsets = [16, 0], sizes = [224, 128], strides = [1, 1]} : vector<240x128xf32> to vector<224x128xf32>
    %cst_11 = arith.constant 0.000000e+00 : f32
    %26 = vector.broadcast %cst_11 : f32 to vector<16x128xf32>
    %27 = tpu.concatenate %25, %26 in 0 : vector<224x128xf32>, vector<16x128xf32> -> vector<240x128xf32>
    %28 = arith.maximumf %24, %27 : vector<240x128xf32>
    %29 = vector.extract_strided_slice %28 {offsets = [32, 0], sizes = [208, 128], strides = [1, 1]} : vector<240x128xf32> to vector<208x128xf32>
    %cst_12 = arith.constant 0.000000e+00 : f32
    %30 = vector.broadcast %cst_12 : f32 to vector<32x128xf32>
    %31 = tpu.concatenate %29, %30 in 0 : vector<208x128xf32>, vector<32x128xf32> -> vector<240x128xf32>
    %32 = arith.maximumf %28, %31 : vector<240x128xf32>
    %33 = vector.extract_strided_slice %32 {offsets = [36, 0], sizes = [204, 128], strides = [1, 1]} : vector<240x128xf32> to vector<204x128xf32>
    %cst_13 = arith.constant 0.000000e+00 : f32
    %34 = vector.broadcast %cst_13 : f32 to vector<36x128xf32>
    %35 = tpu.concatenate %33, %34 in 0 : vector<204x128xf32>, vector<36x128xf32> -> vector<240x128xf32>
    %36 = arith.maximumf %32, %35 : vector<240x128xf32>
    %37 = vector.shape_cast %36 : vector<240x128xf32> to vector<2x120x128xf32>
    tpu.wait_dma2 semaphore(%arg10 : memref<!tpu.dma_semaphore, #tpu.memory_space<semaphore_mem>>) src(%arg4 : memref<5x128x512xbf16, #tpu.memory_space<any>>) dst(%arg9 : memref<5x128x512xbf16, #tpu.memory_space<vmem>>)
    %cst_14 = arith.constant 0.000000e+00 : f32
    %38 = vector.broadcast %cst_14 : f32 to vector<2x512xf32>
    %39 = vector.extract_strided_slice %37 {offsets = [0, 0, 0], sizes = [2, 1, 128], strides = [1, 1, 1]} : vector<2x120x128xf32> to vector<2x1x128xf32>
    %40 = vector.shape_cast %39 : vector<2x1x128xf32> to vector<2x128xf32>
    %41 = arith.truncf %40 : vector<2x128xf32> to vector<2x128xbf16>
    %c0_15 = arith.constant 0 : index
    %c0_16 = arith.constant 0 : index
    %c0_17 = arith.constant 0 : index
    %42 = vector.load %arg9[%c0_15, %c0_16, %c0_17] : memref<5x128x512xbf16, #tpu.memory_space<vmem>>, vector<1x128x512xbf16>
    %43 = vector.shape_cast %42 : vector<1x128x512xbf16> to vector<128x512xbf16>
    %cst_18 = arith.constant dense<0.000000e+00> : vector<2x512xf32>
    %44 = tpu.matmul %41, %43, %cst_18 {dimension_numbers = #tpu.dot_dimension_numbers<[1], [0], [0], [1], [0, 0, 1, 1], [], []>} : vector<2x128xbf16>, vector<128x512xbf16>, vector<2x512xf32> -> vector<2x512xf32>
    %45 = arith.addf %38, %44 : vector<2x512xf32>
    %46 = vector.extract_strided_slice %37 {offsets = [0, 4, 0], sizes = [2, 1, 128], strides = [1, 1, 1]} : vector<2x120x128xf32> to vector<2x1x128xf32>
    %47 = vector.shape_cast %46 : vector<2x1x128xf32> to vector<2x128xf32>
    %48 = arith.truncf %47 : vector<2x128xf32> to vector<2x128xbf16>
    %c1 = arith.constant 1 : index
    %c0_19 = arith.constant 0 : index
    %c0_20 = arith.constant 0 : index
    %49 = vector.load %arg9[%c1, %c0_19, %c0_20] : memref<5x128x512xbf16, #tpu.memory_space<vmem>>, vector<1x128x512xbf16>
    %50 = vector.shape_cast %49 : vector<1x128x512xbf16> to vector<128x512xbf16>
    %cst_21 = arith.constant dense<0.000000e+00> : vector<2x512xf32>
    %51 = tpu.matmul %48, %50, %cst_21 {dimension_numbers = #tpu.dot_dimension_numbers<[1], [0], [0], [1], [0, 0, 1, 1], [], []>} : vector<2x128xbf16>, vector<128x512xbf16>, vector<2x512xf32> -> vector<2x512xf32>
    %52 = arith.addf %45, %51 : vector<2x512xf32>
    %53 = vector.extract_strided_slice %37 {offsets = [0, 8, 0], sizes = [2, 1, 128], strides = [1, 1, 1]} : vector<2x120x128xf32> to vector<2x1x128xf32>
    %54 = vector.shape_cast %53 : vector<2x1x128xf32> to vector<2x128xf32>
    %55 = arith.truncf %54 : vector<2x128xf32> to vector<2x128xbf16>
    %c2 = arith.constant 2 : index
    %c0_22 = arith.constant 0 : index
    %c0_23 = arith.constant 0 : index
    %56 = vector.load %arg9[%c2, %c0_22, %c0_23] : memref<5x128x512xbf16, #tpu.memory_space<vmem>>, vector<1x128x512xbf16>
    %57 = vector.shape_cast %56 : vector<1x128x512xbf16> to vector<128x512xbf16>
    %cst_24 = arith.constant dense<0.000000e+00> : vector<2x512xf32>
    %58 = tpu.matmul %55, %57, %cst_24 {dimension_numbers = #tpu.dot_dimension_numbers<[1], [0], [0], [1], [0, 0, 1, 1], [], []>} : vector<2x128xbf16>, vector<128x512xbf16>, vector<2x512xf32> -> vector<2x512xf32>
    %59 = arith.addf %52, %58 : vector<2x512xf32>
    %60 = vector.extract_strided_slice %37 {offsets = [0, 12, 0], sizes = [2, 1, 128], strides = [1, 1, 1]} : vector<2x120x128xf32> to vector<2x1x128xf32>
    %61 = vector.shape_cast %60 : vector<2x1x128xf32> to vector<2x128xf32>
    %62 = arith.truncf %61 : vector<2x128xf32> to vector<2x128xbf16>
    %c3 = arith.constant 3 : index
    %c0_25 = arith.constant 0 : index
    %c0_26 = arith.constant 0 : index
    %63 = vector.load %arg9[%c3, %c0_25, %c0_26] : memref<5x128x512xbf16, #tpu.memory_space<vmem>>, vector<1x128x512xbf16>
    %64 = vector.shape_cast %63 : vector<1x128x512xbf16> to vector<128x512xbf16>
    %cst_27 = arith.constant dense<0.000000e+00> : vector<2x512xf32>
    %65 = tpu.matmul %62, %64, %cst_27 {dimension_numbers = #tpu.dot_dimension_numbers<[1], [0], [0], [1], [0, 0, 1, 1], [], []>} : vector<2x128xbf16>, vector<128x512xbf16>, vector<2x512xf32> -> vector<2x512xf32>
    %66 = arith.addf %59, %65 : vector<2x512xf32>
    %67 = vector.extract_strided_slice %37 {offsets = [0, 16, 0], sizes = [2, 1, 128], strides = [1, 1, 1]} : vector<2x120x128xf32> to vector<2x1x128xf32>
    %68 = vector.shape_cast %67 : vector<2x1x128xf32> to vector<2x128xf32>
    %69 = arith.truncf %68 : vector<2x128xf32> to vector<2x128xbf16>
    %c4 = arith.constant 4 : index
    %c0_28 = arith.constant 0 : index
    %c0_29 = arith.constant 0 : index
    %70 = vector.load %arg9[%c4, %c0_28, %c0_29] : memref<5x128x512xbf16, #tpu.memory_space<vmem>>, vector<1x128x512xbf16>
    %71 = vector.shape_cast %70 : vector<1x128x512xbf16> to vector<128x512xbf16>
    %cst_30 = arith.constant dense<0.000000e+00> : vector<2x512xf32>
    %72 = tpu.matmul %69, %71, %cst_30 {dimension_numbers = #tpu.dot_dimension_numbers<[1], [0], [0], [1], [0, 0, 1, 1], [], []>} : vector<2x128xbf16>, vector<128x512xbf16>, vector<2x512xf32> -> vector<2x512xf32>
    %73 = arith.addf %66, %72 : vector<2x512xf32>
    %c0_31 = arith.constant 0 : index
    %c0_32 = arith.constant 0 : index
    %74 = vector.load %arg5[%c0_31, %c0_32] : memref<1x512xf32, #tpu.memory_space<vmem>>, vector<1x512xf32>
    %75 = vector.broadcast %74 : vector<1x512xf32> to vector<2x512xf32>
    %76 = arith.addf %73, %75 : vector<2x512xf32>
    %cst_33 = arith.constant 0.000000e+00 : f32
    %77 = vector.broadcast %cst_33 : f32 to vector<2x512xf32>
    %78 = arith.maximumf %76, %77 : vector<2x512xf32>
    %79 = arith.truncf %78 : vector<2x512xf32> to vector<2x512xbf16>
    %c0_34 = arith.constant 0 : index
    %c0_35 = arith.constant 0 : index
    %80 = vector.load %arg6[%c0_34, %c0_35] : memref<512x128xbf16, #tpu.memory_space<vmem>>, vector<512x128xbf16>
    %cst_36 = arith.constant dense<0.000000e+00> : vector<2x128xf32>
    %81 = tpu.matmul %79, %80, %cst_36 {dimension_numbers = #tpu.dot_dimension_numbers<[1], [0], [0], [1], [0, 0, 1, 1], [], []>} : vector<2x512xbf16>, vector<512x128xbf16>, vector<2x128xf32> -> vector<2x128xf32>
    %c0_37 = arith.constant 0 : index
    %c0_38 = arith.constant 0 : index
    %82 = vector.load %arg7[%c0_37, %c0_38] : memref<1x128xf32, #tpu.memory_space<vmem>>, vector<1x128xf32>
    %83 = vector.broadcast %82 : vector<1x128xf32> to vector<2x128xf32>
    %84 = arith.addf %81, %83 : vector<2x128xf32>
    %cst_39 = arith.constant dense<0xFF800000> : vector<2xf32>
    %85 = vector.multi_reduction <maximumf>, %84, %cst_39 [1] : vector<2x128xf32> to vector<2xf32>
    %86 = vector.shape_cast %85 : vector<2xf32> to vector<2x1xf32>
    %87 = vector.broadcast %86 : vector<2x1xf32> to vector<2x128xf32>
    %88 = arith.subf %84, %87 : vector<2x128xf32>
    %89 = math.exp %88 : vector<2x128xf32>
    %cst_40 = arith.constant dense<0.000000e+00> : vector<2xf32>
    %90 = vector.multi_reduction <add>, %89, %cst_40 [1] : vector<2x128xf32> to vector<2xf32>
    %91 = vector.shape_cast %90 : vector<2xf32> to vector<2x1xf32>
    %92 = tpu.reciprocal %91 {approx = true} : vector<2x1xf32> -> vector<2x1xf32>
    %93 = vector.broadcast %92 : vector<2x1xf32> to vector<2x128xf32>
    %94 = arith.mulf %89, %93 : vector<2x128xf32>
    %c0_41 = arith.constant 0 : index
    %c0_42 = arith.constant 0 : index
    %c0_43 = arith.constant 0 : index
    %95 = vector.load %arg8[%c0_41, %c0_42, %c0_43] : memref<1x2x128xf32, #tpu.memory_space<vmem>>, vector<1x2x128xf32>
    %96 = vector.shape_cast %95 : vector<1x2x128xf32> to vector<2x128xf32>
    %97 = vector.shape_cast %94 : vector<2x128xf32> to vector<1x2x128xf32>
    tpu.vector_store %arg8[%c0_41, %c0_42, %c0_43], %97 {strides = array<i32>} : memref<1x2x128xf32, #tpu.memory_space<vmem>>, vector<1x2x128xf32>,
    return
  }
  func.func @transform_0(%arg0: i32) -> (i32, i32, i32) {
    %c0_i32 = arith.constant 0 : i32
    %c0_i32_0 = arith.constant 0 : i32
    %c0_i32_1 = arith.constant 0 : i32
    return %arg0, %c0_i32, %c0_i32_0 : i32, i32, i32
  }
  func.func @transform_1(%arg0: i32) -> (i32, i32) {
    %c0_i32 = arith.constant 0 : i32
    %c0_i32_0 = arith.constant 0 : i32
    %c0_i32_1 = arith.constant 0 : i32
    return %c0_i32, %c0_i32_0 : i32, i32
  }
  func.func @transform_2(%arg0: i32) -> (i32, i32) {
    %c0_i32 = arith.constant 0 : i32
    %c0_i32_0 = arith.constant 0 : i32
    %c0_i32_1 = arith.constant 0 : i32
    return %c0_i32, %c0_i32_0 : i32, i32
  }
  func.func @transform_4(%arg0: i32) -> (i32, i32) {
    %c0_i32 = arith.constant 0 : i32
    %c0_i32_0 = arith.constant 0 : i32
    %c0_i32_1 = arith.constant 0 : i32
    return %c0_i32, %c0_i32_0 : i32, i32
  }
  func.func @transform_5(%arg0: i32) -> (i32, i32) {
    %c0_i32 = arith.constant 0 : i32
    %c0_i32_0 = arith.constant 0 : i32
    %c0_i32_1 = arith.constant 0 : i32
    return %c0_i32, %c0_i32_0 : i32, i32
  }
  func.func @transform_6(%arg0: i32) -> (i32, i32) {
    %c0_i32 = arith.constant 0 : i32
    %c0_i32_0 = arith.constant 0 : i32
    %c0_i32_1 = arith.constant 0 : i32
    return %c0_i32, %c0_i32_0 : i32, i32
  }
  func.func @transform_7(%arg0: i32) -> (i32, i32, i32) {
    %c0_i32 = arith.constant 0 : i32
    %c0_i32_0 = arith.constant 0 : i32
    %c0_i32_1 = arith.constant 0 : i32
    return %arg0, %c0_i32, %c0_i32_0 : i32, i32, i32
  }
}

</mosaic_0001>

<llo_original>
// kernel: cnn_forward.1
$region0: #{cnn_forward.1}
  #allocation0 [shape = 'u32[]', space=smem, size = 0x4, offset = 0x4, fixed_abs, tag = 'smem constant byte address 0x4 - core index']
  #allocation1 [shape = 'u32[72,128]{1,0:T(1,128)}', space=vmem, size = 0x9000, scoped, tag = 'internal scratch']
  #allocation2 [shape = 'bf16[5,128,512]{2,1,0:T(8,128)(2,1)}', space=vmem, size = 0xa0000, scoped, tag = 'scratch operand']
  #allocation3 [shape = 's32[1]{0}', space=sflag, size = 0x4, scoped, tag = 'scratch operand']
  #allocation6 [shape = 's32[]', space=sflag, size = 0x4, offset = 0, fixed_abs, tag = 'sflag constant byte address 0x0 - dummy sync flag']
  %s0 = inlined_call_operand.vmem [shape: bf16[1,240,128], index: 0, kind: input, shape index: {}]
  %s1 = inlined_call_operand.vmem [shape: bf16[128,128], index: 1, kind: input, shape index: {}]
  %s2 = inlined_call_operand.vmem [shape: f32[1,128], index: 2, kind: input, shape index: {}]
  %s3 = inlined_call_operand.vmem [shape: bf16[5,128,512], index: 3, kind: input, shape index: {}]
  %s4 = inlined_call_operand.vmem [shape: f32[1,512], index: 4, kind: input, shape index: {}]
  %s5 = inlined_call_operand.vmem [shape: bf16[512,128], index: 5, kind: input, shape index: {}]
  %s6 = inlined_call_operand.vmem [shape: f32[1,128], index: 6, kind: input, shape index: {}]
  %s7 = inlined_call_operand.hbm [shape: f32[1,2,128], index: 7, kind: output, shape index: {}]
  %s8 = sld [smem:[#allocation0]]
  $region53: #{cnn_forward.1} parent=0
    _
  %s10 = ssub.s32 1, %s8
  %s11 = scalar_select 0, %s10, %s8
  $region1: #{cnn_forward.1} parent=0
    #allocation4 [shape = 'u8[1024]{0}', space=vmem, size = 0x400, scoped, tag = 'output window, operand 0, single buffered']
    #allocation5 [shape = 's32[1]{0}', space=sflag, size = 0x4, scoped, tag = 'scoped memory for cnn_forward.1']
    %12 = vsyncpa [#allocation5], 0
    // Predicated region
    $region2: #{cnn_forward.1} parent=1 // pred_check
      _
    $region3: #{cnn_forward.1} parent=1 // pred_check_branch
      %14 = sbr.rel (0) target = $region5
    $region4: #{cnn_forward.1} parent=1 // pred_region
      _
    $region5: #{cnn_forward.1} parent=1 // pred_fallthru
      _
    // Predicated region
    $region6: #{cnn_forward.1} parent=1 // pred_check
      _
    $region7: #{cnn_forward.1} parent=1 // pred_check_branch
      %16 = sbr.rel (0) target = $region9
    $region8: #{cnn_forward.1} parent=1 // pred_region
      _
    $region9: #{cnn_forward.1} parent=1 // pred_fallthru
      _
    // Predicated region
    $region10: #{cnn_forward.1} parent=1 // pred_check
      _
    $region11: #{cnn_forward.1} parent=1 // pred_check_branch
      %18 = sbr.rel (0) target = $region13
    $region12: #{cnn_forward.1} parent=1 // pred_region
      _
    $region13: #{cnn_forward.1} parent=1 // pred_fallthru
      _
    // Predicated region
    $region14: #{cnn_forward.1} parent=1 // pred_check
      _
    $region15: #{cnn_forward.1} parent=1 // pred_check_branch
      %20 = sbr.rel (0) target = $region17
    $region16: #{cnn_forward.1} parent=1 // pred_region
      _
    $region17: #{cnn_forward.1} parent=1 // pred_fallthru
      _
    // Predicated region
    $region18: #{cnn_forward.1} parent=1 // pred_check
      _
    $region19: #{cnn_forward.1} parent=1 // pred_check_branch
      %22 = sbr.rel (0) target = $region21
    $region20: #{cnn_forward.1} parent=1 // pred_region
      _
    $region21: #{cnn_forward.1} parent=1 // pred_fallthru
      _
    // Predicated region
    $region22: #{cnn_forward.1} parent=1 // pred_check
      _
    $region23: #{cnn_forward.1} parent=1 // pred_check_branch
      %24 = sbr.rel (0) target = $region25
    $region24: #{cnn_forward.1} parent=1 // pred_region
      _
    $region25: #{cnn_forward.1} parent=1 // pred_fallthru
      _
    // Predicated region
    $region26: #{cnn_forward.1} parent=1 // pred_check
      _
    $region27: #{cnn_forward.1} parent=1 // pred_check_branch
      %26 = sbr.rel (0) target = $region29
    $region28: #{cnn_forward.1} parent=1 // pred_region
      loop: start=0, step=1, limit=1
      $region30: #{cnn_forward.1} parent=28 // loop_pre_header
        _
      $region31: #{cnn_forward.1} parent=28 // loop_header
        %s28 = sphi 0, %s32
        %p29 = scmp.ge.s32.totalorder %s28, 1
        %s33 = sphi %s3, %s3
        %s34 = sphi [#allocation2], [#allocation2]
      $region32: #{cnn_forward.1} parent=28 // loop_header_branch
        %31 = sbr.rel (%p29) target = $region36
      $region33: #{cnn_forward.1} parent=28 // loop_body
        %v35 = vld [vmem:[%s33] sm:$0xff]
        %36 = vst [vmem:[%s34] sm:$0xff] %v35
        %v37 = vld [vmem:[%s33 + $0x8] sm:$0xff]
        %38 = vst [vmem:[%s34 + $0x8] sm:$0xff] %v37
        %v39 = vld [vmem:[%s33 + $0x10] sm:$0xff]
        %40 = vst [vmem:[%s34 + $0x10] sm:$0xff] %v39
        %v41 = vld [vmem:[%s33 + $0x18] sm:$0xff]
        %42 = vst [vmem:[%s34 + $0x18] sm:$0xff] %v41
        %v43 = vld [vmem:[%s33 + $0x20] sm:$0xff]
        %44 = vst [vmem:[%s34 + $0x20] sm:$0xff] %v43
        %v45 = vld [vmem:[%s33 + $0x28] sm:$0xff]
        %46 = vst [vmem:[%s34 + $0x28] sm:$0xff] %v45
        %v47 = vld [vmem:[%s33 + $0x30] sm:$0xff]
        %48 = vst [vmem:[%s34 + $0x30] sm:$0xff] %v47
        %v49 = vld [vmem:[%s33 + $0x38] sm:$0xff]
        %50 = vst [vmem:[%s34 + $0x38] sm:$0xff] %v49
        %v51 = vld [vmem:[%s33 + $0x40] sm:$0xff]
        %52 = vst [vmem:[%s34 + $0x40] sm:$0xff] %v51
        %v53 = vld [vmem:[%s33 + $0x48] sm:$0xff]
        %54 = vst [vmem:[%s34 + $0x48] sm:$0xff] %v53
        %v55 = vld [vmem:[%s33 + $0x50] sm:$0xff]
        %56 = vst [vmem:[%s34 + $0x50] sm:$0xff] %v55
        %v57 = vld [vmem:[%s33 + $0x58] sm:$0xff]
        %58 = vst [vmem:[%s34 + $0x58] sm:$0xff] %v57
        %v59 = vld [vmem:[%s33 + $0x60] sm:$0xff]
        %60 = vst [vmem:[%s34 + $0x60] sm:$0xff] %v59
        %v61 = vld [vmem:[%s33 + $0x68] sm:$0xff]
        %62 = vst [vmem:[%s34 + $0x68] sm:$0xff] %v61
        %v63 = vld [vmem:[%s33 + $0x70] sm:$0xff]
        %64 = vst [vmem:[%s34 + $0x70] sm:$0xff] %v63
        %v65 = vld [vmem:[%s33 + $0x78] sm:$0xff]
        %66 = vst [vmem:[%s34 + $0x78] sm:$0xff] %v65
        %v67 = vld [vmem:[%s33 + $0x80] sm:$0xff]
        %68 = vst [vmem:[%s34 + $0x80] sm:$0xff] %v67
        %v69 = vld [vmem:[%s33 + $0x88] sm:$0xff]
        %70 = vst [vmem:[%s34 + $0x88] sm:$0xff] %v69
        %v71 = vld [vmem:[%s33 + $0x90] sm:$0xff]
        %72 = vst [vmem:[%s34 + $0x90] sm:$0xff] %v71
        %v73 = vld [vmem:[%s33 + $0x98] sm:$0xff]
        %74 = vst [vmem:[%s34 + $0x98] sm:$0xff] %v73
        %v75 = vld [vmem:[%s33 + $0xa0] sm:$0xff]
        %76 = vst [vmem:[%s34 + $0xa0] sm:$0xff] %v75
        %v77 = vld [vmem:[%s33 + $0xa8] sm:$0xff]
        %78 = vst [vmem:[%s34 + $0xa8] sm:$0xff] %v77
        %v79 = vld [vmem:[%s33 + $0xb0] sm:$0xff]
        %80 = vst [vmem:[%s34 + $0xb0] sm:$0xff] %v79
        %v81 = vld [vmem:[%s33 + $0xb8] sm:$0xff]
        %82 = vst [vmem:[%s34 + $0xb8] sm:$0xff] %v81
        %v83 = vld [vmem:[%s33 + $0xc0] sm:$0xff]
        %84 = vst [vmem:[%s34 + $0xc0] sm:$0xff] %v83
        %v85 = vld [vmem:[%s33 + $0xc8] sm:$0xff]
        %86 = vst [vmem:[%s34 + $0xc8] sm:$0xff] %v85
        %v87 = vld [vmem:[%s33 + $0xd0] sm:$0xff]
        %88 = vst [vmem:[%s34 + $0xd0] sm:$0xff] %v87
        %v89 = vld [vmem:[%s33 + $0xd8] sm:$0xff]
        %90 = vst [vmem:[%s34 + $0xd8] sm:$0xff] %v89
        %v91 = vld [vmem:[%s33 + $0xe0] sm:$0xff]
        %92 = vst [vmem:[%s34 + $0xe0] sm:$0xff] %v91
        %v93 = vld [vmem:[%s33 + $0xe8] sm:$0xff]
        %94 = vst [vmem:[%s34 + $0xe8] sm:$0xff] %v93
        %v95 = vld [vmem:[%s33 + $0xf0] sm:$0xff]
        %96 = vst [vmem:[%s34 + $0xf0] sm:$0xff] %v95
        %v97 = vld [vmem:[%s33 + $0xf8] sm:$0xff]
        %98 = vst [vmem:[%s34 + $0xf8] sm:$0xff] %v97
        %v99 = vld [vmem:[%s33 + $0x100] sm:$0xff]
        %100 = vst [vmem:[%s34 + $0x100] sm:$0xff] %v99
        %v101 = vld [vmem:[%s33 + $0x108] sm:$0xff]
        %102 = vst [vmem:[%s34 + $0x108] sm:$0xff] %v101
        %v103 = vld [vmem:[%s33 + $0x110] sm:$0xff]
        %104 = vst [vmem:[%s34 + $0x110] sm:$0xff] %v103
        %v105 = vld [vmem:[%s33 + $0x118] sm:$0xff]
        %106 = vst [vmem:[%s34 + $0x118] sm:$0xff] %v105
        %v107 = vld [vmem:[%s33 + $0x120] sm:$0xff]
        %108 = vst [vmem:[%s34 + $0x120] sm:$0xff] %v107
        %v109 = vld [vmem:[%s33 + $0x128] sm:$0xff]
        %110 = vst [vmem:[%s34 + $0x128] sm:$0xff] %v109
        %v111 = vld [vmem:[%s33 + $0x130] sm:$0xff]
        %112 = vst [vmem:[%s34 + $0x130] sm:$0xff] %v111
        %v113 = vld [vmem:[%s33 + $0x138] sm:$0xff]
        %114 = vst [vmem:[%s34 + $0x138] sm:$0xff] %v113
        %v115 = vld [vmem:[%s33 + $0x140] sm:$0xff]
        %116 = vst [vmem:[%s34 + $0x140] sm:$0xff] %v115
        %v117 = vld [vmem:[%s33 + $0x148] sm:$0xff]
        %118 = vst [vmem:[%s34 + $0x148] sm:$0xff] %v117
        %v119 = vld [vmem:[%s33 + $0x150] sm:$0xff]
        %120 = vst [vmem:[%s34 + $0x150] sm:$0xff] %v119
        %v121 = vld [vmem:[%s33 + $0x158] sm:$0xff]
        %122 = vst [vmem:[%s34 + $0x158] sm:$0xff] %v121
        %v123 = vld [vmem:[%s33 + $0x160] sm:$0xff]
        %124 = vst [vmem:[%s34 + $0x160] sm:$0xff] %v123
        %v125 = vld [vmem:[%s33 + $0x168] sm:$0xff]
        %126 = vst [vmem:[%s34 + $0x168] sm:$0xff] %v125
        %v127 = vld [vmem:[%s33 + $0x170] sm:$0xff]
        %128 = vst [vmem:[%s34 + $0x170] sm:$0xff] %v127
        %v129 = vld [vmem:[%s33 + $0x178] sm:$0xff]
        %130 = vst [vmem:[%s34 + $0x178] sm:$0xff] %v129
        %v131 = vld [vmem:[%s33 + $0x180] sm:$0xff]
        %132 = vst [vmem:[%s34 + $0x180] sm:$0xff] %v131
        %v133 = vld [vmem:[%s33 + $0x188] sm:$0xff]
        %134 = vst [vmem:[%s34 + $0x188] sm:$0xff] %v133
        %v135 = vld [vmem:[%s33 + $0x190] sm:$0xff]
        %136 = vst [vmem:[%s34 + $0x190] sm:$0xff] %v135
        %v137 = vld [vmem:[%s33 + $0x198] sm:$0xff]
        %138 = vst [vmem:[%s34 + $0x198] sm:$0xff] %v137
        %v139 = vld [vmem:[%s33 + $0x1a0] sm:$0xff]
        %140 = vst [vmem:[%s34 + $0x1a0] sm:$0xff] %v139
        %v141 = vld [vmem:[%s33 + $0x1a8] sm:$0xff]
        %142 = vst [vmem:[%s34 + $0x1a8] sm:$0xff] %v141
        %v143 = vld [vmem:[%s33 + $0x1b0] sm:$0xff]
        %144 = vst [vmem:[%s34 + $0x1b0] sm:$0xff] %v143
        %v145 = vld [vmem:[%s33 + $0x1b8] sm:$0xff]
        %146 = vst [vmem:[%s34 + $0x1b8] sm:$0xff] %v145
        %v147 = vld [vmem:[%s33 + $0x1c0] sm:$0xff]
        %148 = vst [vmem:[%s34 + $0x1c0] sm:$0xff] %v147
        %v149 = vld [vmem:[%s33 + $0x1c8] sm:$0xff]
        %150 = vst [vmem:[%s34 + $0x1c8] sm:$0xff] %v149
        %v151 = vld [vmem:[%s33 + $0x1d0] sm:$0xff]
        %152 = vst [vmem:[%s34 + $0x1d0] sm:$0xff] %v151
        %v153 = vld [vmem:[%s33 + $0x1d8] sm:$0xff]
        %154 = vst [vmem:[%s34 + $0x1d8] sm:$0xff] %v153
        %v155 = vld [vmem:[%s33 + $0x1e0] sm:$0xff]
        %156 = vst [vmem:[%s34 + $0x1e0] sm:$0xff] %v155
        %v157 = vld [vmem:[%s33 + $0x1e8] sm:$0xff]
        %158 = vst [vmem:[%s34 + $0x1e8] sm:$0xff] %v157
        %v159 = vld [vmem:[%s33 + $0x1f0] sm:$0xff]
        %160 = vst [vmem:[%s34 + $0x1f0] sm:$0xff] %v159
        %v161 = vld [vmem:[%s33 + $0x1f8] sm:$0xff]
        %162 = vst [vmem:[%s34 + $0x1f8] sm:$0xff] %v161
        %v163 = vld [vmem:[%s33 + $0x200] sm:$0xff]
        %164 = vst [vmem:[%s34 + $0x200] sm:$0xff] %v163
        %v165 = vld [vmem:[%s33 + $0x208] sm:$0xff]
        %166 = vst [vmem:[%s34 + $0x208] sm:$0xff] %v165
        %v167 = vld [vmem:[%s33 + $0x210] sm:$0xff]
        %168 = vst [vmem:[%s34 + $0x210] sm:$0xff] %v167
        %v169 = vld [vmem:[%s33 + $0x218] sm:$0xff]
        %170 = vst [vmem:[%s34 + $0x218] sm:$0xff] %v169
        %v171 = vld [vmem:[%s33 + $0x220] sm:$0xff]
        %172 = vst [vmem:[%s34 + $0x220] sm:$0xff] %v171
        %v173 = vld [vmem:[%s33 + $0x228] sm:$0xff]
        %174 = vst [vmem:[%s34 + $0x228] sm:$0xff] %v173
        %v175 = vld [vmem:[%s33 + $0x230] sm:$0xff]
        %176 = vst [vmem:[%s34 + $0x230] sm:$0xff] %v175
        %v177 = vld [vmem:[%s33 + $0x238] sm:$0xff]
        %178 = vst [vmem:[%s34 + $0x238] sm:$0xff] %v177
        %v179 = vld [vmem:[%s33 + $0x240] sm:$0xff]
        %180 = vst [vmem:[%s34 + $0x240] sm:$0xff] %v179
        %v181 = vld [vmem:[%s33 + $0x248] sm:$0xff]
        %182 = vst [vmem:[%s34 + $0x248] sm:$0xff] %v181
        %v183 = vld [vmem:[%s33 + $0x250] sm:$0xff]
        %184 = vst [vmem:[%s34 + $0x250] sm:$0xff] %v183
        %v185 = vld [vmem:[%s33 + $0x258] sm:$0xff]
        %186 = vst [vmem:[%s34 + $0x258] sm:$0xff] %v185
        %v187 = vld [vmem:[%s33 + $0x260] sm:$0xff]
        %188 = vst [vmem:[%s34 + $0x260] sm:$0xff] %v187
        %v189 = vld [vmem:[%s33 + $0x268] sm:$0xff]
        %190 = vst [vmem:[%s34 + $0x268] sm:$0xff] %v189
        %v191 = vld [vmem:[%s33 + $0x270] sm:$0xff]
        %192 = vst [vmem:[%s34 + $0x270] sm:$0xff] %v191
        %v193 = vld [vmem:[%s33 + $0x278] sm:$0xff]
        %194 = vst [vmem:[%s34 + $0x278] sm:$0xff] %v193
        %v195 = vld [vmem:[%s33 + $0x280] sm:$0xff]
        %196 = vst [vmem:[%s34 + $0x280] sm:$0xff] %v195
        %v197 = vld [vmem:[%s33 + $0x288] sm:$0xff]
        %198 = vst [vmem:[%s34 + $0x288] sm:$0xff] %v197
        %v199 = vld [vmem:[%s33 + $0x290] sm:$0xff]
        %200 = vst [vmem:[%s34 + $0x290] sm:$0xff] %v199
        %v201 = vld [vmem:[%s33 + $0x298] sm:$0xff]
        %202 = vst [vmem:[%s34 + $0x298] sm:$0xff] %v201
        %v203 = vld [vmem:[%s33 + $0x2a0] sm:$0xff]
        %204 = vst [vmem:[%s34 + $0x2a0] sm:$0xff] %v203
        %v205 = vld [vmem:[%s33 + $0x2a8] sm:$0xff]
        %206 = vst [vmem:[%s34 + $0x2a8] sm:$0xff] %v205
        %v207 = vld [vmem:[%s33 + $0x2b0] sm:$0xff]
        %208 = vst [vmem:[%s34 + $0x2b0] sm:$0xff] %v207
        %v209 = vld [vmem:[%s33 + $0x2b8] sm:$0xff]
        %210 = vst [vmem:[%s34 + $0x2b8] sm:$0xff] %v209
        %v211 = vld [vmem:[%s33 + $0x2c0] sm:$0xff]
        %212 = vst [vmem:[%s34 + $0x2c0] sm:$0xff] %v211
        %v213 = vld [vmem:[%s33 + $0x2c8] sm:$0xff]
        %214 = vst [vmem:[%s34 + $0x2c8] sm:$0xff] %v213
        %v215 = vld [vmem:[%s33 + $0x2d0] sm:$0xff]
        %216 = vst [vmem:[%s34 + $0x2d0] sm:$0xff] %v215
        %v217 = vld [vmem:[%s33 + $0x2d8] sm:$0xff]
        %218 = vst [vmem:[%s34 + $0x2d8] sm:$0xff] %v217
        %v219 = vld [vmem:[%s33 + $0x2e0] sm:$0xff]
        %220 = vst [vmem:[%s34 + $0x2e0] sm:$0xff] %v219
        %v221 = vld [vmem:[%s33 + $0x2e8] sm:$0xff]
        %222 = vst [vmem:[%s34 + $0x2e8] sm:$0xff] %v221
        %v223 = vld [vmem:[%s33 + $0x2f0] sm:$0xff]
        %224 = vst [vmem:[%s34 + $0x2f0] sm:$0xff] %v223
        %v225 = vld [vmem:[%s33 + $0x2f8] sm:$0xff]
        %226 = vst [vmem:[%s34 + $0x2f8] sm:$0xff] %v225
        %v227 = vld [vmem:[%s33 + $0x300] sm:$0xff]
        %228 = vst [vmem:[%s34 + $0x300] sm:$0xff] %v227
        %v229 = vld [vmem:[%s33 + $0x308] sm:$0xff]
        %230 = vst [vmem:[%s34 + $0x308] sm:$0xff] %v229
        %v231 = vld [vmem:[%s33 + $0x310] sm:$0xff]
        %232 = vst [vmem:[%s34 + $0x310] sm:$0xff] %v231
        %v233 = vld [vmem:[%s33 + $0x318] sm:$0xff]
        %234 = vst [vmem:[%s34 + $0x318] sm:$0xff] %v233
        %v235 = vld [vmem:[%s33 + $0x320] sm:$0xff]
        %236 = vst [vmem:[%s34 + $0x320] sm:$0xff] %v235
        %v237 = vld [vmem:[%s33 + $0x328] sm:$0xff]
        %238 = vst [vmem:[%s34 + $0x328] sm:$0xff] %v237
        %v239 = vld [vmem:[%s33 + $0x330] sm:$0xff]
        %240 = vst [vmem:[%s34 + $0x330] sm:$0xff] %v239
        %v241 = vld [vmem:[%s33 + $0x338] sm:$0xff]
        %242 = vst [vmem:[%s34 + $0x338] sm:$0xff] %v241
        %v243 = vld [vmem:[%s33 + $0x340] sm:$0xff]
        %244 = vst [vmem:[%s34 + $0x340] sm:$0xff] %v243
        %v245 = vld [vmem:[%s33 + $0x348] sm:$0xff]
        %246 = vst [vmem:[%s34 + $0x348] sm:$0xff] %v245
        %v247 = vld [vmem:[%s33 + $0x350] sm:$0xff]
        %248 = vst [vmem:[%s34 + $0x350] sm:$0xff] %v247
        %v249 = vld [vmem:[%s33 + $0x358] sm:$0xff]
        %250 = vst [vmem:[%s34 + $0x358] sm:$0xff] %v249
        %v251 = vld [vmem:[%s33 + $0x360] sm:$0xff]
        %252 = vst [vmem:[%s34 + $0x360] sm:$0xff] %v251
        %v253 = vld [vmem:[%s33 + $0x368] sm:$0xff]
        %254 = vst [vmem:[%s34 + $0x368] sm:$0xff] %v253
        %v255 = vld [vmem:[%s33 + $0x370] sm:$0xff]
        %256 = vst [vmem:[%s34 + $0x370] sm:$0xff] %v255
        %v257 = vld [vmem:[%s33 + $0x378] sm:$0xff]
        %258 = vst [vmem:[%s34 + $0x378] sm:$0xff] %v257
        %v259 = vld [vmem:[%s33 + $0x380] sm:$0xff]
        %260 = vst [vmem:[%s34 + $0x380] sm:$0xff] %v259
        %v261 = vld [vmem:[%s33 + $0x388] sm:$0xff]
        %262 = vst [vmem:[%s34 + $0x388] sm:$0xff] %v261
        %v263 = vld [vmem:[%s33 + $0x390] sm:$0xff]
        %264 = vst [vmem:[%s34 + $0x390] sm:$0xff] %v263
        %v265 = vld [vmem:[%s33 + $0x398] sm:$0xff]
        %266 = vst [vmem:[%s34 + $0x398] sm:$0xff] %v265
        %v267 = vld [vmem:[%s33 + $0x3a0] sm:$0xff]
        %268 = vst [vmem:[%s34 + $0x3a0] sm:$0xff] %v267
        %v269 = vld [vmem:[%s33 + $0x3a8] sm:$0xff]
        %270 = vst [vmem:[%s34 + $0x3a8] sm:$0xff] %v269
        %v271 = vld [vmem:[%s33 + $0x3b0] sm:$0xff]
        %272 = vst [vmem:[%s34 + $0x3b0] sm:$0xff] %v271
        %v273 = vld [vmem:[%s33 + $0x3b8] sm:$0xff]
        %274 = vst [vmem:[%s34 + $0x3b8] sm:$0xff] %v273
        %v275 = vld [vmem:[%s33 + $0x3c0] sm:$0xff]
        %276 = vst [vmem:[%s34 + $0x3c0] sm:$0xff] %v275
        %v277 = vld [vmem:[%s33 + $0x3c8] sm:$0xff]
        %278 = vst [vmem:[%s34 + $0x3c8] sm:$0xff] %v277
        %v279 = vld [vmem:[%s33 + $0x3d0] sm:$0xff]
        %280 = vst [vmem:[%s34 + $0x3d0] sm:$0xff] %v279
        %v281 = vld [vmem:[%s33 + $0x3d8] sm:$0xff]
        %282 = vst [vmem:[%s34 + $0x3d8] sm:$0xff] %v281
        %v283 = vld [vmem:[%s33 + $0x3e0] sm:$0xff]
        %284 = vst [vmem:[%s34 + $0x3e0] sm:$0xff] %v283
        %v285 = vld [vmem:[%s33 + $0x3e8] sm:$0xff]
        %286 = vst [vmem:[%s34 + $0x3e8] sm:$0xff] %v285
        %v287 = vld [vmem:[%s33 + $0x3f0] sm:$0xff]
        %288 = vst [vmem:[%s34 + $0x3f0] sm:$0xff] %v287
        %v289 = vld [vmem:[%s33 + $0x3f8] sm:$0xff]
        %290 = vst [vmem:[%s34 + $0x3f8] sm:$0xff] %v289
        %v291 = vld [vmem:[%s33 + $0x400] sm:$0xff]
        %292 = vst [vmem:[%s34 + $0x400] sm:$0xff] %v291
        %v293 = vld [vmem:[%s33 + $0x408] sm:$0xff]
        %294 = vst [vmem:[%s34 + $0x408] sm:$0xff] %v293
        %v295 = vld [vmem:[%s33 + $0x410] sm:$0xff]
        %296 = vst [vmem:[%s34 + $0x410] sm:$0xff] %v295
        %v297 = vld [vmem:[%s33 + $0x418] sm:$0xff]
        %298 = vst [vmem:[%s34 + $0x418] sm:$0xff] %v297
        %v299 = vld [vmem:[%s33 + $0x420] sm:$0xff]
        %300 = vst [vmem:[%s34 + $0x420] sm:$0xff] %v299
        %v301 = vld [vmem:[%s33 + $0x428] sm:$0xff]
        %302 = vst [vmem:[%s34 + $0x428] sm:$0xff] %v301
        %v303 = vld [vmem:[%s33 + $0x430] sm:$0xff]
        %304 = vst [vmem:[%s34 + $0x430] sm:$0xff] %v303
        %v305 = vld [vmem:[%s33 + $0x438] sm:$0xff]
        %306 = vst [vmem:[%s34 + $0x438] sm:$0xff] %v305
        %v307 = vld [vmem:[%s33 + $0x440] sm:$0xff]
        %308 = vst [vmem:[%s34 + $0x440] sm:$0xff] %v307
        %v309 = vld [vmem:[%s33 + $0x448] sm:$0xff]
        %310 = vst [vmem:[%s34 + $0x448] sm:$0xff] %v309
        %v311 = vld [vmem:[%s33 + $0x450] sm:$0xff]
        %312 = vst [vmem:[%s34 + $0x450] sm:$0xff] %v311
        %v313 = vld [vmem:[%s33 + $0x458] sm:$0xff]
        %314 = vst [vmem:[%s34 + $0x458] sm:$0xff] %v313
        %v315 = vld [vmem:[%s33 + $0x460] sm:$0xff]
        %316 = vst [vmem:[%s34 + $0x460] sm:$0xff] %v315
        %v317 = vld [vmem:[%s33 + $0x468] sm:$0xff]
        %318 = vst [vmem:[%s34 + $0x468] sm:$0xff] %v317
        %v319 = vld [vmem:[%s33 + $0x470] sm:$0xff]
        %320 = vst [vmem:[%s34 + $0x470] sm:$0xff] %v319
        %v321 = vld [vmem:[%s33 + $0x478] sm:$0xff]
        %322 = vst [vmem:[%s34 + $0x478] sm:$0xff] %v321
        %v323 = vld [vmem:[%s33 + $0x480] sm:$0xff]
        %324 = vst [vmem:[%s34 + $0x480] sm:$0xff] %v323
        %v325 = vld [vmem:[%s33 + $0x488] sm:$0xff]
        %326 = vst [vmem:[%s34 + $0x488] sm:$0xff] %v325
        %v327 = vld [vmem:[%s33 + $0x490] sm:$0xff]
        %328 = vst [vmem:[%s34 + $0x490] sm:$0xff] %v327
        %v329 = vld [vmem:[%s33 + $0x498] sm:$0xff]
        %330 = vst [vmem:[%s34 + $0x498] sm:$0xff] %v329
        %v331 = vld [vmem:[%s33 + $0x4a0] sm:$0xff]
        %332 = vst [vmem:[%s34 + $0x4a0] sm:$0xff] %v331
        %v333 = vld [vmem:[%s33 + $0x4a8] sm:$0xff]
        %334 = vst [vmem:[%s34 + $0x4a8] sm:$0xff] %v333
        %v335 = vld [vmem:[%s33 + $0x4b0] sm:$0xff]
        %336 = vst [vmem:[%s34 + $0x4b0] sm:$0xff] %v335
        %v337 = vld [vmem:[%s33 + $0x4b8] sm:$0xff]
        %338 = vst [vmem:[%s34 + $0x4b8] sm:$0xff] %v337
        %v339 = vld [vmem:[%s33 + $0x4c0] sm:$0xff]
        %340 = vst [vmem:[%s34 + $0x4c0] sm:$0xff] %v339
        %v341 = vld [vmem:[%s33 + $0x4c8] sm:$0xff]
        %342 = vst [vmem:[%s34 + $0x4c8] sm:$0xff] %v341
        %v343 = vld [vmem:[%s33 + $0x4d0] sm:$0xff]
        %344 = vst [vmem:[%s34 + $0x4d0] sm:$0xff] %v343
        %v345 = vld [vmem:[%s33 + $0x4d8] sm:$0xff]
        %346 = vst [vmem:[%s34 + $0x4d8] sm:$0xff] %v345
        %v347 = vld [vmem:[%s33 + $0x4e0] sm:$0xff]
        %348 = vst [vmem:[%s34 + $0x4e0] sm:$0xff] %v347
        %v349 = vld [vmem:[%s33 + $0x4e8] sm:$0xff]
        %350 = vst [vmem:[%s34 + $0x4e8] sm:$0xff] %v349
        %v351 = vld [vmem:[%s33 + $0x4f0] sm:$0xff]
        %352 = vst [vmem:[%s34 + $0x4f0] sm:$0xff] %v351
        %v353 = vld [vmem:[%s33 + $0x4f8] sm:$0xff]
        %354 = vst [vmem:[%s34 + $0x4f8] sm:$0xff] %v353
      $region34: #{cnn_forward.1} parent=28 // loop_footer
        %s32 = sadd.s32 1, %s28
      $region35: #{cnn_forward.1} parent=28 // loop_footer_branch
        %27 = sbr.rel target = $region31
      $region36: #{cnn_forward.1} parent=28 // loop_exit
        _
    $region29: #{cnn_forward.1} parent=1 // pred_fallthru
      _
    // Predicated region
    $region37: #{cnn_forward.1} parent=1 // pred_check
      _
    $region38: #{cnn_forward.1} parent=1 // pred_check_branch
      %356 = sbr.rel target = $region40
    $region39: #{cnn_forward.1} parent=1 // pred_region
      _
    $region40: #{cnn_forward.1} parent=1 // pred_fallthru
      _
    // Predicated region
    $region41: #{cnn_forward.1} parent=1 // pred_check
      _
    $region42: #{cnn_forward.1} parent=1 // pred_check_branch
      %359 = sbr.rel (0) target = $region44
    $region43: #{cnn_forward.1} parent=1 // pred_region
      %360 = vsyncadd [#allocation3], 20480
    $region44: #{cnn_forward.1} parent=1 // pred_fallthru
      _
    %v361 = vld [vmem:[%s0] sm:$0xf]
    %v362 = vld [vmem:[%s0 + $0x4] sm:$0xf]
    %v363 = vld [vmem:[%s0 + $0x8] sm:$0xf]
    %v364 = vld [vmem:[%s0 + $0xc] sm:$0xf]
    %v365 = vld [vmem:[%s0 + $0x10] sm:$0xf]
    %v366 = vld [vmem:[%s0 + $0x14] sm:$0xf]
    %v367 = vld [vmem:[%s0 + $0x18] sm:$0xf]
    %v368 = vld [vmem:[%s0 + $0x1c] sm:$0xf]
    %v369 = vld [vmem:[%s0 + $0x20] sm:$0xf]
    %v370 = vld [vmem:[%s0 + $0x24] sm:$0xf]
    %v371 = vld [vmem:[%s0 + $0x28] sm:$0xf]
    %v372 = vld [vmem:[%s0 + $0x2c] sm:$0xf]
    %v373 = vld [vmem:[%s0 + $0x30] sm:$0xf]
    %v374 = vld [vmem:[%s0 + $0x34] sm:$0xf]
    %v375 = vld [vmem:[%s0 + $0x38] sm:$0xf]
    %v376 = vld [vmem:[%s0 + $0x3c] sm:$0xf]
    %v377 = vld [vmem:[%s0 + $0x40] sm:$0xf]
    %v378 = vld [vmem:[%s0 + $0x44] sm:$0xf]
    %v379 = vld [vmem:[%s0 + $0x48] sm:$0xf]
    %v380 = vld [vmem:[%s0 + $0x4c] sm:$0xf]
    %v381 = vld [vmem:[%s0 + $0x50] sm:$0xf]
    %v382 = vld [vmem:[%s0 + $0x54] sm:$0xf]
    %v383 = vld [vmem:[%s0 + $0x58] sm:$0xf]
    %v384 = vld [vmem:[%s0 + $0x5c] sm:$0xf]
    %v385 = vld [vmem:[%s0 + $0x60] sm:$0xf]
    %v386 = vld [vmem:[%s0 + $0x64] sm:$0xf]
    %v387 = vld [vmem:[%s0 + $0x68] sm:$0xf]
    %v388 = vld [vmem:[%s0 + $0x6c] sm:$0xf]
    %v389 = vld [vmem:[%s0 + $0x70] sm:$0xf]
    %v390 = vld [vmem:[%s0 + $0x74] sm:$0xf]
    %v391 = vld [vmem:[%s1] sm:$0xf]
    %v392 = vld [vmem:[%s1 + $0x4] sm:$0xf]
    %v393 = vld [vmem:[%s1 + $0x8] sm:$0xf]
    %v394 = vld [vmem:[%s1 + $0xc] sm:$0xf]
    %v395 = vld [vmem:[%s1 + $0x10] sm:$0xf]
    %v396 = vld [vmem:[%s1 + $0x14] sm:$0xf]
    %v397 = vld [vmem:[%s1 + $0x18] sm:$0xf]
    %v398 = vld [vmem:[%s1 + $0x1c] sm:$0xf]
    %v399 = vld [vmem:[%s1 + $0x20] sm:$0xf]
    %v400 = vld [vmem:[%s1 + $0x24] sm:$0xf]
    %v401 = vld [vmem:[%s1 + $0x28] sm:$0xf]
    %v402 = vld [vmem:[%s1 + $0x2c] sm:$0xf]
    %v403 = vld [vmem:[%s1 + $0x30] sm:$0xf]
    %v404 = vld [vmem:[%s1 + $0x34] sm:$0xf]
    %v405 = vld [vmem:[%s1 + $0x38] sm:$0xf]
    %v406 = vld [vmem:[%s1 + $0x3c] sm:$0xf]
    %v407 = vld [vmem:[%s2] sm:$0x1]
    %v409 = vperm.slane %v407, 0
    %v441 = vunpack.c.l.b16 %v361
    %v442 = vunpack.c.l.b16 %v362
    %v443 = vunpack.c.l.b16 %v363
    %v444 = vunpack.c.l.b16 %v364
    %v445 = vunpack.c.l.b16 %v365
    %v446 = vunpack.c.l.b16 %v366
    %v447 = vunpack.c.l.b16 %v367
    %v448 = vunpack.c.l.b16 %v368
    %v449 = vunpack.c.l.b16 %v369
    %v450 = vunpack.c.l.b16 %v370
    %v451 = vunpack.c.l.b16 %v371
    %v452 = vunpack.c.l.b16 %v372
    %v453 = vunpack.c.l.b16 %v373
    %v454 = vunpack.c.l.b16 %v374
    %v455 = vunpack.c.l.b16 %v375
    %v456 = vunpack.c.l.b16 %v376
    %v457 = vunpack.c.l.b16 %v377
    %v458 = vunpack.c.l.b16 %v378
    %v459 = vunpack.c.l.b16 %v379
    %v460 = vunpack.c.l.b16 %v380
    %v461 = vunpack.c.l.b16 %v381
    %v462 = vunpack.c.l.b16 %v382
    %v463 = vunpack.c.l.b16 %v383
    %v464 = vunpack.c.l.b16 %v384
    %v465 = vunpack.c.l.b16 %v385
    %v466 = vunpack.c.l.b16 %v386
    %v467 = vunpack.c.l.b16 %v387
    %v468 = vunpack.c.l.b16 %v388
    %v469 = vunpack.c.l.b16 %v389
    %v470 = vunpack.c.l.b16 %v390
    %v471 = vpack.c.b16 %v442, %v441
    %v472 = vpack.c.b16 %v444, %v443
    %v473 = vpack.c.b16 %v446, %v445
    %v474 = vpack.c.b16 %v448, %v447
    %v475 = vpack.c.b16 %v450, %v449
    %v476 = vpack.c.b16 %v452, %v451
    %v477 = vpack.c.b16 %v454, %v453
    %v478 = vpack.c.b16 %v456, %v455
    %v479 = vpack.c.b16 %v458, %v457
    %v480 = vpack.c.b16 %v460, %v459
    %v481 = vpack.c.b16 %v462, %v461
    %v482 = vpack.c.b16 %v464, %v463
    %v483 = vpack.c.b16 %v466, %v465
    %v484 = vpack.c.b16 %v468, %v467
    %v485 = vpack.c.b16 %v470, %v469
    %v517 = vunpack.c.l.b16 %v391
    %v518 = vunpack.c.l.b16 %v392
    %v519 = vunpack.c.l.b16 %v393
    %v520 = vunpack.c.l.b16 %v394
    %v521 = vunpack.c.l.b16 %v395
    %v522 = vunpack.c.l.b16 %v396
    %v523 = vunpack.c.l.b16 %v397
    %v524 = vunpack.c.l.b16 %v398
    %v525 = vunpack.c.l.b16 %v399
    %v526 = vunpack.c.l.b16 %v400
    %v527 = vunpack.c.l.b16 %v401
    %v528 = vunpack.c.l.b16 %v402
    %v529 = vunpack.c.l.b16 %v403
    %v530 = vunpack.c.l.b16 %v404
    %v531 = vunpack.c.l.b16 %v405
    %v532 = vunpack.c.l.b16 %v406
    %v533 = vpack.c.b16 %v518, %v517
    %v534 = vpack.c.b16 %v520, %v519
    %v535 = vpack.c.b16 %v522, %v521
    %v536 = vpack.c.b16 %v524, %v523
    %v537 = vpack.c.b16 %v526, %v525
    %v538 = vpack.c.b16 %v528, %v527
    %v539 = vpack.c.b16 %v530, %v529
    %v540 = vpack.c.b16 %v532, %v531
    %549 = vmatpush.bf16.msra.mxu0 %v540
    %550 = vmatpush.bf16.msra.mxu0 %v539
    %551 = vmatpush.bf16.msra.mxu0 %v538
    %552 = vmatpush.bf16.msra.mxu0 %v537
    %553 = vmatpush.bf16.msra.mxu0 %v536
    %554 = vmatpush.bf16.msra.mxu0 %v535
    %555 = vmatpush.bf16.msra.mxu0 %v534
    %556 = vmatpush.bf16.msra.mxu0 %v533
    %557 = vmatmul.bf16.gmra.mxu0 %v471
    %v558 = vpop.f32.mrf.mxu0
    %v559 = vadd.f32 %v409, %v558
    %v560 = vpop.f32.mrf.mxu0
    %v561 = vadd.f32 %v409, %v560
    %562 = vmatmul.bf16.gmra.mxu0 %v472
    %v563 = vpop.f32.mrf.mxu0
    %v564 = vadd.f32 %v409, %v563
    %v565 = vpop.f32.mrf.mxu0
    %v566 = vadd.f32 %v409, %v565
    %567 = vmatmul.bf16.gmra.mxu0 %v473
    %v568 = vpop.f32.mrf.mxu0
    %v569 = vadd.f32 %v409, %v568
    %v570 = vpop.f32.mrf.mxu0
    %v571 = vadd.f32 %v409, %v570
    %572 = vmatmul.bf16.gmra.mxu0 %v474
    %v573 = vpop.f32.mrf.mxu0
    %v574 = vadd.f32 %v409, %v573
    %v575 = vpop.f32.mrf.mxu0
    %v576 = vadd.f32 %v409, %v575
    %577 = vmatmul.bf16.gmra.mxu0 %v475
    %v578 = vpop.f32.mrf.mxu0
    %v579 = vadd.f32 %v409, %v578
    %v580 = vpop.f32.mrf.mxu0
    %v581 = vadd.f32 %v409, %v580
    %582 = vmatmul.bf16.gmra.mxu0 %v476
    %v583 = vpop.f32.mrf.mxu0
    %v584 = vadd.f32 %v409, %v583
    %v585 = vpop.f32.mrf.mxu0
    %v586 = vadd.f32 %v409, %v585
    %587 = vmatmul.bf16.gmra.mxu0 %v477
    %v588 = vpop.f32.mrf.mxu0
    %v589 = vadd.f32 %v409, %v588
    %v590 = vpop.f32.mrf.mxu0
    %v591 = vadd.f32 %v409, %v590
    %592 = vmatmul.bf16.gmra.mxu0 %v478
    %v593 = vpop.f32.mrf.mxu0
    %v594 = vadd.f32 %v409, %v593
    %v595 = vpop.f32.mrf.mxu0
    %v596 = vadd.f32 %v409, %v595
    %597 = vmatmul.bf16.gmra.mxu0 %v479
    %v598 = vpop.f32.mrf.mxu0
    %v599 = vadd.f32 %v409, %v598
    %v600 = vpop.f32.mrf.mxu0
    %v601 = vadd.f32 %v409, %v600
    %602 = vmatmul.bf16.gmra.mxu0 %v480
    %v603 = vpop.f32.mrf.mxu0
    %v604 = vadd.f32 %v409, %v603
    %v605 = vpop.f32.mrf.mxu0
    %v606 = vadd.f32 %v409, %v605
    %607 = vmatmul.bf16.gmra.mxu0 %v481
    %v608 = vpop.f32.mrf.mxu0
    %v609 = vadd.f32 %v409, %v608
    %v610 = vpop.f32.mrf.mxu0
    %v611 = vadd.f32 %v409, %v610
    %612 = vmatmul.bf16.gmra.mxu0 %v482
    %v613 = vpop.f32.mrf.mxu0
    %v614 = vadd.f32 %v409, %v613
    %v615 = vpop.f32.mrf.mxu0
    %v616 = vadd.f32 %v409, %v615
    %617 = vmatmul.bf16.gmra.mxu0 %v483
    %v618 = vpop.f32.mrf.mxu0
    %v619 = vadd.f32 %v409, %v618
    %v620 = vpop.f32.mrf.mxu0
    %v621 = vadd.f32 %v409, %v620
    %622 = vmatmul.bf16.gmra.mxu0 %v484
    %v623 = vpop.f32.mrf.mxu0
    %v624 = vadd.f32 %v409, %v623
    %v625 = vpop.f32.mrf.mxu0
    %v626 = vadd.f32 %v409, %v625
    %627 = vmatmul.bf16.gmra.mxu0 %v485
    %v628 = vpop.f32.mrf.mxu0
    %v629 = vadd.f32 %v409, %v628
    %v630 = vpop.f32.mrf.mxu0
    %v631 = vadd.f32 %v409, %v630
    %632 = vdwg.mxu0
    %v633 = vmax.f32 %v559, 0.0
    %v634 = vmax.f32 %v561, 0.0
    %v635 = vmax.f32 %v564, 0.0
    %v636 = vmax.f32 %v566, 0.0
    %v637 = vmax.f32 %v569, 0.0
    %v638 = vmax.f32 %v571, 0.0
    %v639 = vmax.f32 %v574, 0.0
    %v640 = vmax.f32 %v576, 0.0
    %v641 = vmax.f32 %v579, 0.0
    %v642 = vmax.f32 %v581, 0.0
    %v643 = vmax.f32 %v584, 0.0
    %v644 = vmax.f32 %v586, 0.0
    %v645 = vmax.f32 %v589, 0.0
    %v646 = vmax.f32 %v591, 0.0
    %v647 = vmax.f32 %v594, 0.0
    %v648 = vmax.f32 %v596, 0.0
    %v649 = vmax.f32 %v599, 0.0
    %v650 = vmax.f32 %v601, 0.0
    %v651 = vmax.f32 %v604, 0.0
    %v652 = vmax.f32 %v606, 0.0
    %v653 = vmax.f32 %v609, 0.0
    %v654 = vmax.f32 %v611, 0.0
    %v655 = vmax.f32 %v614, 0.0
    %v656 = vmax.f32 %v616, 0.0
    %v657 = vmax.f32 %v619, 0.0
    %v658 = vmax.f32 %v621, 0.0
    %v659 = vmax.f32 %v624, 0.0
    %v660 = vmax.f32 %v626, 0.0
    %v661 = vmax.f32 %v629, 0.0
    %v662 = vmax.f32 %v631, 0.0
    %vm693 = vcmask 1046528
    %v694 = vrot.slane %v633, 1
    %v695 = vrot.slane %v634, 1
    %v696 = vsel %vm693, %v694, %v695
    %v697 = vrot.slane %v635, 1
    %v698 = vsel %vm693, %v695, %v697
    %v699 = vrot.slane %v636, 1
    %v700 = vsel %vm693, %v697, %v699
    %v701 = vrot.slane %v637, 1
    %v702 = vsel %vm693, %v699, %v701
    %v703 = vrot.slane %v638, 1
    %v704 = vsel %vm693, %v701, %v703
    %v705 = vrot.slane %v639, 1
    %v706 = vsel %vm693, %v703, %v705
    %v707 = vrot.slane %v640, 1
    %v708 = vsel %vm693, %v705, %v707
    %v709 = vrot.slane %v641, 1
    %v710 = vsel %vm693, %v707, %v709
    %v711 = vrot.slane %v642, 1
    %v712 = vsel %vm693, %v709, %v711
    %v713 = vrot.slane %v643, 1
    %v714 = vsel %vm693, %v711, %v713
    %v715 = vrot.slane %v644, 1
    %v716 = vsel %vm693, %v713, %v715
    %v717 = vrot.slane %v645, 1
    %v718 = vsel %vm693, %v715, %v717
    %v719 = vrot.slane %v646, 1
    %v720 = vsel %vm693, %v717, %v719
    %v721 = vrot.slane %v647, 1
    %v722 = vsel %vm693, %v719, %v721
    %v723 = vrot.slane %v648, 1
    %v724 = vsel %vm693, %v721, %v723
    %v725 = vrot.slane %v649, 1
    %v726 = vsel %vm693, %v723, %v725
    %v727 = vrot.slane %v650, 1
    %v728 = vsel %vm693, %v725, %v727
    %v729 = vrot.slane %v651, 1
    %v730 = vsel %vm693, %v727, %v729
    %v731 = vrot.slane %v652, 1
    %v732 = vsel %vm693, %v729, %v731
    %v733 = vrot.slane %v653, 1
    %v734 = vsel %vm693, %v731, %v733
    %v735 = vrot.slane %v654, 1
    %v736 = vsel %vm693, %v733, %v735
    %v737 = vrot.slane %v655, 1
    %v738 = vsel %vm693, %v735, %v737
    %v739 = vrot.slane %v656, 1
    %v740 = vsel %vm693, %v737, %v739
    %v741 = vrot.slane %v657, 1
    %v742 = vsel %vm693, %v739, %v741
    %v743 = vrot.slane %v658, 1
    %v744 = vsel %vm693, %v741, %v743
    %v745 = vrot.slane %v659, 1
    %v746 = vsel %vm693, %v743, %v745
    %v747 = vrot.slane %v660, 1
    %v748 = vsel %vm693, %v745, %v747
    %v749 = vrot.slane %v661, 1
    %v750 = vsel %vm693, %v747, %v749
    %v751 = vrot.slane %v662, 1
    %v752 = vsel %vm693, %v749, %v751
    %v783 = vsel %vm693, %v751, 0.0
    %v784 = vmax.f32 %v633, %v696
    %v785 = vmax.f32 %v634, %v698
    %v786 = vmax.f32 %v635, %v700
    %v787 = vmax.f32 %v636, %v702
    %v788 = vmax.f32 %v637, %v704
    %v789 = vmax.f32 %v638, %v706
    %v790 = vmax.f32 %v639, %v708
    %v791 = vmax.f32 %v640, %v710
    %v792 = vmax.f32 %v641, %v712
    %v793 = vmax.f32 %v642, %v714
    %v794 = vmax.f32 %v643, %v716
    %v795 = vmax.f32 %v644, %v718
    %v796 = vmax.f32 %v645, %v720
    %v797 = vmax.f32 %v646, %v722
    %v798 = vmax.f32 %v647, %v724
    %v799 = vmax.f32 %v648, %v726
    %v800 = vmax.f32 %v649, %v728
    %v801 = vmax.f32 %v650, %v730
    %v802 = vmax.f32 %v651, %v732
    %v803 = vmax.f32 %v652, %v734
    %v804 = vmax.f32 %v653, %v736
    %v805 = vmax.f32 %v654, %v738
    %v806 = vmax.f32 %v655, %v740
    %v807 = vmax.f32 %v656, %v742
    %v808 = vmax.f32 %v657, %v744
    %v809 = vmax.f32 %v658, %v746
    %v810 = vmax.f32 %v659, %v748
    %v811 = vmax.f32 %v660, %v750
    %v812 = vmax.f32 %v661, %v752
    %v813 = vmax.f32 %v662, %v783
    %vm844 = vcmask 1045504
    %v845 = vrot.slane %v784, 2
    %v846 = vrot.slane %v785, 2
    %v847 = vsel %vm844, %v845, %v846
    %v848 = vrot.slane %v786, 2
    %v849 = vsel %vm844, %v846, %v848
    %v850 = vrot.slane %v787, 2
    %v851 = vsel %vm844, %v848, %v850
    %v852 = vrot.slane %v788, 2
    %v853 = vsel %vm844, %v850, %v852
    %v854 = vrot.slane %v789, 2
    %v855 = vsel %vm844, %v852, %v854
    %v856 = vrot.slane %v790, 2
    %v857 = vsel %vm844, %v854, %v856
    %v858 = vrot.slane %v791, 2
    %v859 = vsel %vm844, %v856, %v858
    %v860 = vrot.slane %v792, 2
    %v861 = vsel %vm844, %v858, %v860
    %v862 = vrot.slane %v793, 2
    %v863 = vsel %vm844, %v860, %v862
    %v864 = vrot.slane %v794, 2
    %v865 = vsel %vm844, %v862, %v864
    %v866 = vrot.slane %v795, 2
    %v867 = vsel %vm844, %v864, %v866
    %v868 = vrot.slane %v796, 2
    %v869 = vsel %vm844, %v866, %v868
    %v870 = vrot.slane %v797, 2
    %v871 = vsel %vm844, %v868, %v870
    %v872 = vrot.slane %v798, 2
    %v873 = vsel %vm844, %v870, %v872
    %v874 = vrot.slane %v799, 2
    %v875 = vsel %vm844, %v872, %v874
    %v876 = vrot.slane %v800, 2
    %v877 = vsel %vm844, %v874, %v876
    %v878 = vrot.slane %v801, 2
    %v879 = vsel %vm844, %v876, %v878
    %v880 = vrot.slane %v802, 2
    %v881 = vsel %vm844, %v878, %v880
    %v882 = vrot.slane %v803, 2
    %v883 = vsel %vm844, %v880, %v882
    %v884 = vrot.slane %v804, 2
    %v885 = vsel %vm844, %v882, %v884
    %v886 = vrot.slane %v805, 2
    %v887 = vsel %vm844, %v884, %v886
    %v888 = vrot.slane %v806, 2
    %v889 = vsel %vm844, %v886, %v888
    %v890 = vrot.slane %v807, 2
    %v891 = vsel %vm844, %v888, %v890
    %v892 = vrot.slane %v808, 2
    %v893 = vsel %vm844, %v890, %v892
    %v894 = vrot.slane %v809, 2
    %v895 = vsel %vm844, %v892, %v894
    %v896 = vrot.slane %v810, 2
    %v897 = vsel %vm844, %v894, %v896
    %v898 = vrot.slane %v811, 2
    %v899 = vsel %vm844, %v896, %v898
    %v900 = vrot.slane %v812, 2
    %v901 = vsel %vm844, %v898, %v900
    %v902 = vrot.slane %v813, 2
    %v903 = vsel %vm844, %v900, %v902
    %v934 = vsel %vm844, %v902, 0.0
    %v935 = vmax.f32 %v784, %v847
    %v936 = vmax.f32 %v785, %v849
    %v937 = vmax.f32 %v786, %v851
    %v938 = vmax.f32 %v787, %v853
    %v939 = vmax.f32 %v788, %v855
    %v940 = vmax.f32 %v789, %v857
    %v941 = vmax.f32 %v790, %v859
    %v942 = vmax.f32 %v791, %v861
    %v943 = vmax.f32 %v792, %v863
    %v944 = vmax.f32 %v793, %v865
    %v945 = vmax.f32 %v794, %v867
    %v946 = vmax.f32 %v795, %v869
    %v947 = vmax.f32 %v796, %v871
    %v948 = vmax.f32 %v797, %v873
    %v949 = vmax.f32 %v798, %v875
    %v950 = vmax.f32 %v799, %v877
    %v951 = vmax.f32 %v800, %v879
    %v952 = vmax.f32 %v801, %v881
    %v953 = vmax.f32 %v802, %v883
    %v954 = vmax.f32 %v803, %v885
    %v955 = vmax.f32 %v804, %v887
    %v956 = vmax.f32 %v805, %v889
    %v957 = vmax.f32 %v806, %v891
    %v958 = vmax.f32 %v807, %v893
    %v959 = vmax.f32 %v808, %v895
    %v960 = vmax.f32 %v809, %v897
    %v961 = vmax.f32 %v810, %v899
    %v962 = vmax.f32 %v811, %v901
    %v963 = vmax.f32 %v812, %v903
    %v964 = vmax.f32 %v813, %v934
    %vm995 = vcmask 1043456
    %v996 = vrot.slane %v935, 4
    %v997 = vrot.slane %v936, 4
    %v998 = vsel %vm995, %v996, %v997
    %v999 = vrot.slane %v937, 4
    %v1000 = vsel %vm995, %v997, %v999
    %v1001 = vrot.slane %v938, 4
    %v1002 = vsel %vm995, %v999, %v1001
    %v1003 = vrot.slane %v939, 4
    %v1004 = vsel %vm995, %v1001, %v1003
    %v1005 = vrot.slane %v940, 4
    %v1006 = vsel %vm995, %v1003, %v1005
    %v1007 = vrot.slane %v941, 4
    %v1008 = vsel %vm995, %v1005, %v1007
    %v1009 = vrot.slane %v942, 4
    %v1010 = vsel %vm995, %v1007, %v1009
    %v1011 = vrot.slane %v943, 4
    %v1012 = vsel %vm995, %v1009, %v1011
    %v1013 = vrot.slane %v944, 4
    %v1014 = vsel %vm995, %v1011, %v1013
    %v1015 = vrot.slane %v945, 4
    %v1016 = vsel %vm995, %v1013, %v1015
    %v1017 = vrot.slane %v946, 4
    %v1018 = vsel %vm995, %v1015, %v1017
    %v1019 = vrot.slane %v947, 4
    %v1020 = vsel %vm995, %v1017, %v1019
    %v1021 = vrot.slane %v948, 4
    %v1022 = vsel %vm995, %v1019, %v1021
    %v1023 = vrot.slane %v949, 4
    %v1024 = vsel %vm995, %v1021, %v1023
    %v1025 = vrot.slane %v950, 4
    %v1026 = vsel %vm995, %v1023, %v1025
    %v1027 = vrot.slane %v951, 4
    %v1028 = vsel %vm995, %v1025, %v1027
    %v1029 = vrot.slane %v952, 4
    %v1030 = vsel %vm995, %v1027, %v1029
    %v1031 = vrot.slane %v953, 4
    %v1032 = vsel %vm995, %v1029, %v1031
    %v1033 = vrot.slane %v954, 4
    %v1034 = vsel %vm995, %v1031, %v1033
    %v1035 = vrot.slane %v955, 4
    %v1036 = vsel %vm995, %v1033, %v1035
    %v1037 = vrot.slane %v956, 4
    %v1038 = vsel %vm995, %v1035, %v1037
    %v1039 = vrot.slane %v957, 4
    %v1040 = vsel %vm995, %v1037, %v1039
    %v1041 = vrot.slane %v958, 4
    %v1042 = vsel %vm995, %v1039, %v1041
    %v1043 = vrot.slane %v959, 4
    %v1044 = vsel %vm995, %v1041, %v1043
    %v1045 = vrot.slane %v960, 4
    %v1046 = vsel %vm995, %v1043, %v1045
    %v1047 = vrot.slane %v961, 4
    %v1048 = vsel %vm995, %v1045, %v1047
    %v1049 = vrot.slane %v962, 4
    %v1050 = vsel %vm995, %v1047, %v1049
    %v1051 = vrot.slane %v963, 4
    %v1052 = vsel %vm995, %v1049, %v1051
    %v1053 = vrot.slane %v964, 4
    %v1054 = vsel %vm995, %v1051, %v1053
    %v1085 = vsel %vm995, %v1053, 0.0
    %v1086 = vmax.f32 %v935, %v998
    %v1087 = vmax.f32 %v936, %v1000
    %v1088 = vmax.f32 %v937, %v1002
    %v1089 = vmax.f32 %v938, %v1004
    %v1090 = vmax.f32 %v939, %v1006
    %v1091 = vmax.f32 %v940, %v1008
    %v1092 = vmax.f32 %v941, %v1010
    %v1093 = vmax.f32 %v942, %v1012
    %v1094 = vmax.f32 %v943, %v1014
    %v1095 = vmax.f32 %v944, %v1016
    %v1096 = vmax.f32 %v945, %v1018
    %v1097 = vmax.f32 %v946, %v1020
    %v1098 = vmax.f32 %v947, %v1022
    %v1099 = vmax.f32 %v948, %v1024
    %v1100 = vmax.f32 %v949, %v1026
    %v1101 = vmax.f32 %v950, %v1028
    %v1102 = vmax.f32 %v951, %v1030
    %v1103 = vmax.f32 %v952, %v1032
    %v1104 = vmax.f32 %v953, %v1034
    %v1105 = vmax.f32 %v954, %v1036
    %v1106 = vmax.f32 %v955, %v1038
    %v1107 = vmax.f32 %v956, %v1040
    %v1108 = vmax.f32 %v957, %v1042
    %v1109 = vmax.f32 %v958, %v1044
    %v1110 = vmax.f32 %v959, %v1046
    %v1111 = vmax.f32 %v960, %v1048
    %v1112 = vmax.f32 %v961, %v1050
    %v1113 = vmax.f32 %v962, %v1052
    %v1114 = vmax.f32 %v963, %v1054
    %v1115 = vmax.f32 %v964, %v1085
    %v1116 = vmax.f32 %v1086, %v1087
    %v1117 = vmax.f32 %v1087, %v1088
    %v1118 = vmax.f32 %v1088, %v1089
    %v1119 = vmax.f32 %v1089, %v1090
    %v1120 = vmax.f32 %v1090, %v1091
    %v1121 = vmax.f32 %v1091, %v1092
    %v1122 = vmax.f32 %v1092, %v1093
    %v1123 = vmax.f32 %v1093, %v1094
    %v1124 = vmax.f32 %v1094, %v1095
    %v1125 = vmax.f32 %v1095, %v1096
    %v1126 = vmax.f32 %v1096, %v1097
    %v1127 = vmax.f32 %v1097, %v1098
    %v1128 = vmax.f32 %v1098, %v1099
    %v1129 = vmax.f32 %v1099, %v1100
    %v1130 = vmax.f32 %v1101, %v1102
    %v1131 = vmax.f32 %v1102, %v1103
    %v1132 = vmax.f32 %v1103, %v1104
    %v1133 = vmax.f32 %v1104, %v1105
    %v1134 = vmax.f32 %v1105, %v1106
    %v1135 = vmax.f32 %v1106, %v1107
    %v1136 = vmax.f32 %v1107, %v1108
    %v1137 = vmax.f32 %v1108, %v1109
    %v1138 = vmax.f32 %v1109, %v1110
    %v1139 = vmax.f32 %v1110, %v1111
    %v1140 = vmax.f32 %v1111, %v1112
    %v1141 = vmax.f32 %v1112, %v1113
    %v1142 = vmax.f32 %v1113, %v1114
    %v1143 = vmax.f32 %v1114, %v1115
    %v1144 = vmax.f32 %v1116, %v1118
    %v1145 = vmax.f32 %v1117, %v1119
    %v1146 = vmax.f32 %v1118, %v1120
    %v1147 = vmax.f32 %v1120, %v1122
    %v1148 = vmax.f32 %v1121, %v1123
    %v1149 = vmax.f32 %v1122, %v1124
    %v1150 = vmax.f32 %v1123, %v1125
    %v1151 = vmax.f32 %v1124, %v1126
    %v1152 = vmax.f32 %v1125, %v1127
    %v1153 = vmax.f32 %v1126, %v1128
    %v1154 = vmax.f32 %v1127, %v1129
    %v1155 = vmax.f32 %v1130, %v1132
    %v1156 = vmax.f32 %v1131, %v1133
    %v1157 = vmax.f32 %v1132, %v1134
    %v1158 = vmax.f32 %v1134, %v1136
    %v1159 = vmax.f32 %v1135, %v1137
    %v1160 = vmax.f32 %v1136, %v1138
    %v1161 = vmax.f32 %v1137, %v1139
    %v1162 = vmax.f32 %v1138, %v1140
    %v1163 = vmax.f32 %v1139, %v1141
    %v1164 = vmax.f32 %v1140, %v1142
    %v1165 = vmax.f32 %v1141, %v1143
    %v1166 = vmax.f32 %v1144, %v1147
    %v1167 = vmax.f32 %v1145, %v1148
    %v1168 = vmax.f32 %v1146, %v1149
    %v1169 = vmax.f32 %v1147, %v1151
    %v1170 = vmax.f32 %v1148, %v1152
    %v1171 = vmax.f32 %v1149, %v1153
    %v1172 = vmax.f32 %v1150, %v1154
    %v1173 = vmax.f32 %v1155, %v1158
    %v1174 = vmax.f32 %v1156, %v1159
    %v1175 = vmax.f32 %v1157, %v1160
    %v1176 = vmax.f32 %v1158, %v1162
    %v1177 = vmax.f32 %v1159, %v1163
    %v1178 = vmax.f32 %v1160, %v1164
    %v1179 = vmax.f32 %v1161, %v1165
    %v1188 = vrot.slane %v1169, 4
    %v1189 = vrot.slane %v1170, 4
    %v1190 = vsel %vm995, %v1188, %v1189
    %v1191 = vrot.slane %v1171, 4
    %v1192 = vsel %vm995, %v1189, %v1191
    %v1193 = vrot.slane %v1172, 4
    %v1194 = vsel %vm995, %v1191, %v1193
    %v1195 = vrot.slane %v1176, 4
    %v1196 = vrot.slane %v1177, 4
    %v1197 = vsel %vm995, %v1195, %v1196
    %v1198 = vrot.slane %v1178, 4
    %v1199 = vsel %vm995, %v1196, %v1198
    %v1200 = vrot.slane %v1179, 4
    %v1201 = vsel %vm995, %v1198, %v1200
    %v1208 = vmax.f32 %v1166, %v1190
    %v1209 = vmax.f32 %v1167, %v1192
    %v1210 = vmax.f32 %v1168, %v1194
    %v1211 = vmax.f32 %v1173, %v1197
    %v1212 = vmax.f32 %v1174, %v1199
    %v1213 = vmax.f32 %v1175, %v1201
    %s1214 = smul.u32 4, 5
    %s1215 = smul.u32 %s1214, 16
    %s1216 = smul.u32 %s1215, 4
    %s1217 = sshll.u32 %s1216, 4
    %1218 = dma.done [#allocation3], %s1217
    %v1219 = vpack.c.bf16 %v1208, %v1208
    %v1220 = vpack.c.bf16 %v1211, %v1211
    %v1221 = vld [vmem:[#allocation2] sm:$0xff]
    %v1222 = vld [vmem:[#allocation2 + $0x8] sm:$0xff]
    %v1223 = vld [vmem:[#allocation2 + $0x10] sm:$0xff]
    %v1224 = vld [vmem:[#allocation2 + $0x18] sm:$0xff]
    %v1225 = vld [vmem:[#allocation2 + $0x20] sm:$0xff]
    %v1226 = vld [vmem:[#allocation2 + $0x28] sm:$0xff]
    %v1227 = vld [vmem:[#allocation2 + $0x30] sm:$0xff]
    %v1228 = vld [vmem:[#allocation2 + $0x38] sm:$0xff]
    %v1229 = vld [vmem:[#allocation2 + $0x40] sm:$0xff]
    %v1230 = vld [vmem:[#allocation2 + $0x48] sm:$0xff]
    %v1231 = vld [vmem:[#allocation2 + $0x50] sm:$0xff]
    %v1232 = vld [vmem:[#allocation2 + $0x58] sm:$0xff]
    %v1233 = vld [vmem:[#allocation2 + $0x60] sm:$0xff]
    %v1234 = vld [vmem:[#allocation2 + $0x68] sm:$0xff]
    %v1235 = vld [vmem:[#allocation2 + $0x70] sm:$0xff]
    %v1236 = vld [vmem:[#allocation2 + $0x78] sm:$0xff]
    %v1237 = vld [vmem:[#allocation2 + $0x80] sm:$0xff]
    %v1238 = vld [vmem:[#allocation2 + $0x88] sm:$0xff]
    %v1239 = vld [vmem:[#allocation2 + $0x90] sm:$0xff]
    %v1240 = vld [vmem:[#allocation2 + $0x98] sm:$0xff]
    %v1241 = vld [vmem:[#allocation2 + $0xa0] sm:$0xff]
    %v1242 = vld [vmem:[#allocation2 + $0xa8] sm:$0xff]
    %v1243 = vld [vmem:[#allocation2 + $0xb0] sm:$0xff]
    %v1244 = vld [vmem:[#allocation2 + $0xb8] sm:$0xff]
    %v1245 = vld [vmem:[#allocation2 + $0xc0] sm:$0xff]
    %v1246 = vld [vmem:[#allocation2 + $0xc8] sm:$0xff]
    %v1247 = vld [vmem:[#allocation2 + $0xd0] sm:$0xff]
    %v1248 = vld [vmem:[#allocation2 + $0xd8] sm:$0xff]
    %v1249 = vld [vmem:[#allocation2 + $0xe0] sm:$0xff]
    %v1250 = vld [vmem:[#allocation2 + $0xe8] sm:$0xff]
    %v1251 = vld [vmem:[#allocation2 + $0xf0] sm:$0xff]
    %v1252 = vld [vmem:[#allocation2 + $0xf8] sm:$0xff]
    %s1253 = scalar_lea.vmem [#allocation2], 256
    %v1254 = vld [vmem:[%s1253] sm:$0xff]
    %v1255 = vld [vmem:[%s1253 + $0x8] sm:$0xff]
    %v1256 = vld [vmem:[%s1253 + $0x10] sm:$0xff]
    %v1257 = vld [vmem:[%s1253 + $0x18] sm:$0xff]
    %v1258 = vld [vmem:[%s1253 + $0x20] sm:$0xff]
    %v1259 = vld [vmem:[%s1253 + $0x28] sm:$0xff]
    %v1260 = vld [vmem:[%s1253 + $0x30] sm:$0xff]
    %v1261 = vld [vmem:[%s1253 + $0x38] sm:$0xff]
    %v1262 = vld [vmem:[%s1253 + $0x40] sm:$0xff]
    %v1263 = vld [vmem:[%s1253 + $0x48] sm:$0xff]
    %v1264 = vld [vmem:[%s1253 + $0x50] sm:$0xff]
    %v1265 = vld [vmem:[%s1253 + $0x58] sm:$0xff]
    %v1266 = vld [vmem:[%s1253 + $0x60] sm:$0xff]
    %v1267 = vld [vmem:[%s1253 + $0x68] sm:$0xff]
    %v1268 = vld [vmem:[%s1253 + $0x70] sm:$0xff]
    %v1269 = vld [vmem:[%s1253 + $0x78] sm:$0xff]
    %v1270 = vld [vmem:[%s1253 + $0x80] sm:$0xff]
    %v1271 = vld [vmem:[%s1253 + $0x88] sm:$0xff]
    %v1272 = vld [vmem:[%s1253 + $0x90] sm:$0xff]
    %v1273 = vld [vmem:[%s1253 + $0x98] sm:$0xff]
    %v1274 = vld [vmem:[%s1253 + $0xa0] sm:$0xff]
    %v1275 = vld [vmem:[%s1253 + $0xa8] sm:$0xff]
    %v1276 = vld [vmem:[%s1253 + $0xb0] sm:$0xff]
    %v1277 = vld [vmem:[%s1253 + $0xb8] sm:$0xff]
    %v1278 = vld [vmem:[%s1253 + $0xc0] sm:$0xff]
    %v1279 = vld [vmem:[%s1253 + $0xc8] sm:$0xff]
    %v1280 = vld [vmem:[%s1253 + $0xd0] sm:$0xff]
    %v1281 = vld [vmem:[%s1253 + $0xd8] sm:$0xff]
    %v1282 = vld [vmem:[%s1253 + $0xe0] sm:$0xff]
    %v1283 = vld [vmem:[%s1253 + $0xe8] sm:$0xff]
    %v1284 = vld [vmem:[%s1253 + $0xf0] sm:$0xff]
    %v1285 = vld [vmem:[%s1253 + $0xf8] sm:$0xff]
    %v1288 = vunpack.c.l.b16 %v1219
    %v1289 = vunpack.c.l.b16 %v1220
    %v1290 = vrot.slane %v1288, 4
    %v1291 = vrot.slane %v1289, 3
    %vm1292 = vcmask 1041409
    %v1293 = vsel %vm1292, %v1291, %v1290
    %v1294 = vpack.c.b16 %v1293, %v1293
    %v1328 = vunpack.c.l.b16 %v1254
    %v1329 = vunpack.c.h.b16 %v1254
    %v1330 = vunpack.c.l.b16 %v1255
    %v1331 = vunpack.c.h.b16 %v1255
    %v1332 = vunpack.c.l.b16 %v1256
    %v1333 = vunpack.c.h.b16 %v1256
    %v1334 = vunpack.c.l.b16 %v1257
    %v1335 = vunpack.c.h.b16 %v1257
    %v1336 = vunpack.c.l.b16 %v1258
    %v1337 = vunpack.c.h.b16 %v1258
    %v1338 = vunpack.c.l.b16 %v1259
    %v1339 = vunpack.c.h.b16 %v1259
    %v1340 = vunpack.c.l.b16 %v1260
    %v1341 = vunpack.c.h.b16 %v1260
    %v1342 = vunpack.c.l.b16 %v1261
    %v1343 = vunpack.c.h.b16 %v1261
    %v1344 = vunpack.c.l.b16 %v1262
    %v1345 = vunpack.c.h.b16 %v1262
    %v1346 = vunpack.c.l.b16 %v1263
    %v1347 = vunpack.c.h.b16 %v1263
    %v1348 = vunpack.c.l.b16 %v1264
    %v1349 = vunpack.c.h.b16 %v1264
    %v1350 = vunpack.c.l.b16 %v1265
    %v1351 = vunpack.c.h.b16 %v1265
    %v1352 = vunpack.c.l.b16 %v1266
    %v1353 = vunpack.c.h.b16 %v1266
    %v1354 = vunpack.c.l.b16 %v1267
    %v1355 = vunpack.c.h.b16 %v1267
    %v1356 = vunpack.c.l.b16 %v1268
    %v1357 = vunpack.c.h.b16 %v1268
    %v1358 = vunpack.c.l.b16 %v1269
    %v1359 = vunpack.c.h.b16 %v1269
    %v1360 = vunpack.c.l.b16 %v1270
    %v1361 = vunpack.c.h.b16 %v1270
    %v1362 = vunpack.c.l.b16 %v1271
    %v1363 = vunpack.c.h.b16 %v1271
    %v1364 = vunpack.c.l.b16 %v1272
    %v1365 = vunpack.c.h.b16 %v1272
    %v1366 = vunpack.c.l.b16 %v1273
    %v1367 = vunpack.c.h.b16 %v1273
    %v1368 = vunpack.c.l.b16 %v1274
    %v1369 = vunpack.c.h.b16 %v1274
    %v1370 = vunpack.c.l.b16 %v1275
    %v1371 = vunpack.c.h.b16 %v1275
    %v1372 = vunpack.c.l.b16 %v1276
    %v1373 = vunpack.c.h.b16 %v1276
    %v1374 = vunpack.c.l.b16 %v1277
    %v1375 = vunpack.c.h.b16 %v1277
    %v1376 = vunpack.c.l.b16 %v1278
    %v1377 = vunpack.c.h.b16 %v1278
    %v1378 = vunpack.c.l.b16 %v1279
    %v1379 = vunpack.c.h.b16 %v1279
    %v1380 = vunpack.c.l.b16 %v1280
    %v1381 = vunpack.c.h.b16 %v1280
    %v1382 = vunpack.c.l.b16 %v1281
    %v1383 = vunpack.c.h.b16 %v1281
    %v1384 = vunpack.c.l.b16 %v1282
    %v1385 = vunpack.c.h.b16 %v1282
    %v1386 = vunpack.c.l.b16 %v1283
    %v1387 = vunpack.c.h.b16 %v1283
    %v1388 = vunpack.c.l.b16 %v1284
    %v1389 = vunpack.c.h.b16 %v1284
    %v1390 = vunpack.c.l.b16 %v1285
    %v1391 = vunpack.c.h.b16 %v1285
    %v1392 = vpack.c.b16 %v1332, %v1328
    %v1393 = vpack.c.b16 %v1333, %v1329
    %v1394 = vpack.c.b16 %v1334, %v1330
    %v1395 = vpack.c.b16 %v1335, %v1331
    %v1396 = vpack.c.b16 %v1340, %v1336
    %v1397 = vpack.c.b16 %v1341, %v1337
    %v1398 = vpack.c.b16 %v1342, %v1338
    %v1399 = vpack.c.b16 %v1343, %v1339
    %v1400 = vpack.c.b16 %v1348, %v1344
    %v1401 = vpack.c.b16 %v1349, %v1345
    %v1402 = vpack.c.b16 %v1350, %v1346
    %v1403 = vpack.c.b16 %v1351, %v1347
    %v1404 = vpack.c.b16 %v1356, %v1352
    %v1405 = vpack.c.b16 %v1357, %v1353
    %v1406 = vpack.c.b16 %v1358, %v1354
    %v1407 = vpack.c.b16 %v1359, %v1355
    %v1408 = vpack.c.b16 %v1364, %v1360
    %v1409 = vpack.c.b16 %v1365, %v1361
    %v1410 = vpack.c.b16 %v1366, %v1362
    %v1411 = vpack.c.b16 %v1367, %v1363
    %v1412 = vpack.c.b16 %v1372, %v1368
    %v1413 = vpack.c.b16 %v1373, %v1369
    %v1414 = vpack.c.b16 %v1374, %v1370
    %v1415 = vpack.c.b16 %v1375, %v1371
    %v1416 = vpack.c.b16 %v1380, %v1376
    %v1417 = vpack.c.b16 %v1381, %v1377
    %v1418 = vpack.c.b16 %v1382, %v1378
    %v1419 = vpack.c.b16 %v1383, %v1379
    %v1420 = vpack.c.b16 %v1388, %v1384
    %v1421 = vpack.c.b16 %v1389, %v1385
    %v1422 = vpack.c.b16 %v1390, %v1386
    %v1423 = vpack.c.b16 %v1391, %v1387
    %1456 = vmatpush.bf16.msra.mxu0 %v1420
    %1457 = vmatpush.bf16.msra.mxu0 %v1416
    %1458 = vmatpush.bf16.msra.mxu0 %v1412
    %1459 = vmatpush.bf16.msra.mxu0 %v1408
    %1460 = vmatpush.bf16.msra.mxu0 %v1404
    %1461 = vmatpush.bf16.msra.mxu0 %v1400
    %1462 = vmatpush.bf16.msra.mxu0 %v1396
    %1463 = vmatpush.bf16.msra.mxu0 %v1392
    %1464 = vmatmul.bf16.gmra.mxu0 %v1294
    %v1465 = vpop.f32.mrf.mxu0
    %v1466 = vadd.f32 0.0, %v1465
    %v1467 = vpop.f32.mrf.mxu0
    %1468 = vdwg.mxu0
    %1469 = vmatpush.bf16.msra.mxu0 %v1421
    %1470 = vmatpush.bf16.msra.mxu0 %v1417
    %1471 = vmatpush.bf16.msra.mxu0 %v1413
    %1472 = vmatpush.bf16.msra.mxu0 %v1409
    %1473 = vmatpush.bf16.msra.mxu0 %v1405
    %1474 = vmatpush.bf16.msra.mxu0 %v1401
    %1475 = vmatpush.bf16.msra.mxu0 %v1397
    %1476 = vmatpush.bf16.msra.mxu0 %v1393
    %1477 = vmatmul.bf16.gmra.mxu0 %v1294
    %v1478 = vpop.f32.mrf.mxu0
    %v1479 = vadd.f32 0.0, %v1478
    %v1480 = vpop.f32.mrf.mxu0
    %1481 = vdwg.mxu0
    %1482 = vmatpush.bf16.msra.mxu0 %v1422
    %1483 = vmatpush.bf16.msra.mxu0 %v1418
    %1484 = vmatpush.bf16.msra.mxu0 %v1414
    %1485 = vmatpush.bf16.msra.mxu0 %v1410
    %1486 = vmatpush.bf16.msra.mxu0 %v1406
    %1487 = vmatpush.bf16.msra.mxu0 %v1402
    %1488 = vmatpush.bf16.msra.mxu0 %v1398
    %1489 = vmatpush.bf16.msra.mxu0 %v1394
    %1490 = vmatmul.bf16.gmra.mxu0 %v1294
    %v1491 = vpop.f32.mrf.mxu0
    %v1492 = vadd.f32 0.0, %v1491
    %v1493 = vpop.f32.mrf.mxu0
    %1494 = vdwg.mxu0
    %1495 = vmatpush.bf16.msra.mxu0 %v1423
    %1496 = vmatpush.bf16.msra.mxu0 %v1419
    %1497 = vmatpush.bf16.msra.mxu0 %v1415
    %1498 = vmatpush.bf16.msra.mxu0 %v1411
    %1499 = vmatpush.bf16.msra.mxu0 %v1407
    %1500 = vmatpush.bf16.msra.mxu0 %v1403
    %1501 = vmatpush.bf16.msra.mxu0 %v1399
    %1502 = vmatpush.bf16.msra.mxu0 %v1395
    %1503 = vmatmul.bf16.gmra.mxu0 %v1294
    %v1504 = vpop.f32.mrf.mxu0
    %v1505 = vadd.f32 0.0, %v1504
    %v1506 = vpop.f32.mrf.mxu0
    %1507 = vdwg.mxu0
    %v1508 = vrot.slane %v1289, 7
    %v1509 = vsel %vm1292, %v1508, %v1288
    %v1510 = vpack.c.b16 %v1509, %v1509
    %v1544 = vunpack.c.l.b16 %v1221
    %v1545 = vunpack.c.h.b16 %v1221
    %v1546 = vunpack.c.l.b16 %v1222
    %v1547 = vunpack.c.h.b16 %v1222
    %v1548 = vunpack.c.l.b16 %v1223
    %v1549 = vunpack.c.h.b16 %v1223
    %v1550 = vunpack.c.l.b16 %v1224
    %v1551 = vunpack.c.h.b16 %v1224
    %v1552 = vunpack.c.l.b16 %v1225
    %v1553 = vunpack.c.h.b16 %v1225
    %v1554 = vunpack.c.l.b16 %v1226
    %v1555 = vunpack.c.h.b16 %v1226
    %v1556 = vunpack.c.l.b16 %v1227
    %v1557 = vunpack.c.h.b16 %v1227
    %v1558 = vunpack.c.l.b16 %v1228
    %v1559 = vunpack.c.h.b16 %v1228
    %v1560 = vunpack.c.l.b16 %v1229
    %v1561 = vunpack.c.h.b16 %v1229
    %v1562 = vunpack.c.l.b16 %v1230
    %v1563 = vunpack.c.h.b16 %v1230
    %v1564 = vunpack.c.l.b16 %v1231
    %v1565 = vunpack.c.h.b16 %v1231
    %v1566 = vunpack.c.l.b16 %v1232
    %v1567 = vunpack.c.h.b16 %v1232
    %v1568 = vunpack.c.l.b16 %v1233
    %v1569 = vunpack.c.h.b16 %v1233
    %v1570 = vunpack.c.l.b16 %v1234
    %v1571 = vunpack.c.h.b16 %v1234
    %v1572 = vunpack.c.l.b16 %v1235
    %v1573 = vunpack.c.h.b16 %v1235
    %v1574 = vunpack.c.l.b16 %v1236
    %v1575 = vunpack.c.h.b16 %v1236
    %v1576 = vunpack.c.l.b16 %v1237
    %v1577 = vunpack.c.h.b16 %v1237
    %v1578 = vunpack.c.l.b16 %v1238
    %v1579 = vunpack.c.h.b16 %v1238
    %v1580 = vunpack.c.l.b16 %v1239
    %v1581 = vunpack.c.h.b16 %v1239
    %v1582 = vunpack.c.l.b16 %v1240
    %v1583 = vunpack.c.h.b16 %v1240
    %v1584 = vunpack.c.l.b16 %v1241
    %v1585 = vunpack.c.h.b16 %v1241
    %v1586 = vunpack.c.l.b16 %v1242
    %v1587 = vunpack.c.h.b16 %v1242
    %v1588 = vunpack.c.l.b16 %v1243
    %v1589 = vunpack.c.h.b16 %v1243
    %v1590 = vunpack.c.l.b16 %v1244
    %v1591 = vunpack.c.h.b16 %v1244
    %v1592 = vunpack.c.l.b16 %v1245
    %v1593 = vunpack.c.h.b16 %v1245
    %v1594 = vunpack.c.l.b16 %v1246
    %v1595 = vunpack.c.h.b16 %v1246
    %v1596 = vunpack.c.l.b16 %v1247
    %v1597 = vunpack.c.h.b16 %v1247
    %v1598 = vunpack.c.l.b16 %v1248
    %v1599 = vunpack.c.h.b16 %v1248
    %v1600 = vunpack.c.l.b16 %v1249
    %v1601 = vunpack.c.h.b16 %v1249
    %v1602 = vunpack.c.l.b16 %v1250
    %v1603 = vunpack.c.h.b16 %v1250
    %v1604 = vunpack.c.l.b16 %v1251
    %v1605 = vunpack.c.h.b16 %v1251
    %v1606 = vunpack.c.l.b16 %v1252
    %v1607 = vunpack.c.h.b16 %v1252
    %v1608 = vpack.c.b16 %v1548, %v1544
    %v1609 = vpack.c.b16 %v1549, %v1545
    %v1610 = vpack.c.b16 %v1550, %v1546
    %v1611 = vpack.c.b16 %v1551, %v1547
    %v1612 = vpack.c.b16 %v1556, %v1552
    %v1613 = vpack.c.b16 %v1557, %v1553
    %v1614 = vpack.c.b16 %v1558, %v1554
    %v1615 = vpack.c.b16 %v1559, %v1555
    %v1616 = vpack.c.b16 %v1564, %v1560
    %v1617 = vpack.c.b16 %v1565, %v1561
    %v1618 = vpack.c.b16 %v1566, %v1562
    %v1619 = vpack.c.b16 %v1567, %v1563
    %v1620 = vpack.c.b16 %v1572, %v1568
    %v1621 = vpack.c.b16 %v1573, %v1569
    %v1622 = vpack.c.b16 %v1574, %v1570
    %v1623 = vpack.c.b16 %v1575, %v1571
    %v1624 = vpack.c.b16 %v1580, %v1576
    %v1625 = vpack.c.b16 %v1581, %v1577
    %v1626 = vpack.c.b16 %v1582, %v1578
    %v1627 = vpack.c.b16 %v1583, %v1579
    %v1628 = vpack.c.b16 %v1588, %v1584
    %v1629 = vpack.c.b16 %v1589, %v1585
    %v1630 = vpack.c.b16 %v1590, %v1586
    %v1631 = vpack.c.b16 %v1591, %v1587
    %v1632 = vpack.c.b16 %v1596, %v1592
    %v1633 = vpack.c.b16 %v1597, %v1593
    %v1634 = vpack.c.b16 %v1598, %v1594
    %v1635 = vpack.c.b16 %v1599, %v1595
    %v1636 = vpack.c.b16 %v1604, %v1600
    %v1637 = vpack.c.b16 %v1605, %v1601
    %v1638 = vpack.c.b16 %v1606, %v1602
    %v1639 = vpack.c.b16 %v1607, %v1603
    %1672 = vmatpush.bf16.msra.mxu0 %v1636
    %1673 = vmatpush.bf16.msra.mxu0 %v1632
    %1674 = vmatpush.bf16.msra.mxu0 %v1628
    %1675 = vmatpush.bf16.msra.mxu0 %v1624
    %1676 = vmatpush.bf16.msra.mxu0 %v1620
    %1677 = vmatpush.bf16.msra.mxu0 %v1616
    %1678 = vmatpush.bf16.msra.mxu0 %v1612
    %1679 = vmatpush.bf16.msra.mxu0 %v1608
    %1680 = vmatmul.bf16.gmra.mxu0 %v1510
    %v1681 = vpop.f32.mrf.mxu0
    %v1682 = vadd.f32 %v1466, %v1681
    %v1683 = vpop.f32.mrf.mxu0
    %1684 = vdwg.mxu0
    %1685 = vmatpush.bf16.msra.mxu0 %v1637
    %1686 = vmatpush.bf16.msra.mxu0 %v1633
    %1687 = vmatpush.bf16.msra.mxu0 %v1629
    %1688 = vmatpush.bf16.msra.mxu0 %v1625
    %1689 = vmatpush.bf16.msra.mxu0 %v1621
    %1690 = vmatpush.bf16.msra.mxu0 %v1617
    %1691 = vmatpush.bf16.msra.mxu0 %v1613
    %1692 = vmatpush.bf16.msra.mxu0 %v1609
    %1693 = vmatmul.bf16.gmra.mxu0 %v1510
    %v1694 = vpop.f32.mrf.mxu0
    %v1695 = vadd.f32 %v1479, %v1694
    %v1696 = vpop.f32.mrf.mxu0
    %1697 = vdwg.mxu0
    %1698 = vmatpush.bf16.msra.mxu0 %v1638
    %1699 = vmatpush.bf16.msra.mxu0 %v1634
    %1700 = vmatpush.bf16.msra.mxu0 %v1630
    %1701 = vmatpush.bf16.msra.mxu0 %v1626
    %1702 = vmatpush.bf16.msra.mxu0 %v1622
    %1703 = vmatpush.bf16.msra.mxu0 %v1618
    %1704 = vmatpush.bf16.msra.mxu0 %v1614
    %1705 = vmatpush.bf16.msra.mxu0 %v1610
    %1706 = vmatmul.bf16.gmra.mxu0 %v1510
    %v1707 = vpop.f32.mrf.mxu0
    %v1708 = vadd.f32 %v1492, %v1707
    %v1709 = vpop.f32.mrf.mxu0
    %1710 = vdwg.mxu0
    %1711 = vmatpush.bf16.msra.mxu0 %v1639
    %1712 = vmatpush.bf16.msra.mxu0 %v1635
    %1713 = vmatpush.bf16.msra.mxu0 %v1631
    %1714 = vmatpush.bf16.msra.mxu0 %v1627
    %1715 = vmatpush.bf16.msra.mxu0 %v1623
    %1716 = vmatpush.bf16.msra.mxu0 %v1619
    %1717 = vmatpush.bf16.msra.mxu0 %v1615
    %1718 = vmatpush.bf16.msra.mxu0 %v1611
    %1719 = vmatmul.bf16.gmra.mxu0 %v1510
    %v1720 = vpop.f32.mrf.mxu0
    %v1721 = vadd.f32 %v1505, %v1720
    %v1722 = vpop.f32.mrf.mxu0
    %1723 = vdwg.mxu0
    %v1724 = vpack.c.bf16 %v1209, %v1209
    %v1725 = vpack.c.bf16 %v1212, %v1212
    %s1726 = scalar_lea.vmem [#allocation2], 512
    %v1727 = vld [vmem:[%s1726] sm:$0xff]
    %v1728 = vld [vmem:[%s1726 + $0x8] sm:$0xff]
    %v1729 = vld [vmem:[%s1726 + $0x10] sm:$0xff]
    %v1730 = vld [vmem:[%s1726 + $0x18] sm:$0xff]
    %v1731 = vld [vmem:[%s1726 + $0x20] sm:$0xff]
    %v1732 = vld [vmem:[%s1726 + $0x28] sm:$0xff]
    %v1733 = vld [vmem:[%s1726 + $0x30] sm:$0xff]
    %v1734 = vld [vmem:[%s1726 + $0x38] sm:$0xff]
    %v1735 = vld [vmem:[%s1726 + $0x40] sm:$0xff]
    %v1736 = vld [vmem:[%s1726 + $0x48] sm:$0xff]
    %v1737 = vld [vmem:[%s1726 + $0x50] sm:$0xff]
    %v1738 = vld [vmem:[%s1726 + $0x58] sm:$0xff]
    %v1739 = vld [vmem:[%s1726 + $0x60] sm:$0xff]
    %v1740 = vld [vmem:[%s1726 + $0x68] sm:$0xff]
    %v1741 = vld [vmem:[%s1726 + $0x70] sm:$0xff]
    %v1742 = vld [vmem:[%s1726 + $0x78] sm:$0xff]
    %v1743 = vld [vmem:[%s1726 + $0x80] sm:$0xff]
    %v1744 = vld [vmem:[%s1726 + $0x88] sm:$0xff]
    %v1745 = vld [vmem:[%s1726 + $0x90] sm:$0xff]
    %v1746 = vld [vmem:[%s1726 + $0x98] sm:$0xff]
    %v1747 = vld [vmem:[%s1726 + $0xa0] sm:$0xff]
    %v1748 = vld [vmem:[%s1726 + $0xa8] sm:$0xff]
    %v1749 = vld [vmem:[%s1726 + $0xb0] sm:$0xff]
    %v1750 = vld [vmem:[%s1726 + $0xb8] sm:$0xff]
    %v1751 = vld [vmem:[%s1726 + $0xc0] sm:$0xff]
    %v1752 = vld [vmem:[%s1726 + $0xc8] sm:$0xff]
    %v1753 = vld [vmem:[%s1726 + $0xd0] sm:$0xff]
    %v1754 = vld [vmem:[%s1726 + $0xd8] sm:$0xff]
    %v1755 = vld [vmem:[%s1726 + $0xe0] sm:$0xff]
    %v1756 = vld [vmem:[%s1726 + $0xe8] sm:$0xff]
    %v1757 = vld [vmem:[%s1726 + $0xf0] sm:$0xff]
    %v1758 = vld [vmem:[%s1726 + $0xf8] sm:$0xff]
    %v1761 = vunpack.c.l.b16 %v1724
    %v1762 = vunpack.c.l.b16 %v1725
    %v1763 = vrot.slane %v1762, 7
    %v1764 = vsel %vm1292, %v1763, %v1761
    %v1765 = vpack.c.b16 %v1764, %v1764
    %v1799 = vunpack.c.l.b16 %v1727
    %v1800 = vunpack.c.h.b16 %v1727
    %v1801 = vunpack.c.l.b16 %v1728
    %v1802 = vunpack.c.h.b16 %v1728
    %v1803 = vunpack.c.l.b16 %v1729
    %v1804 = vunpack.c.h.b16 %v1729
    %v1805 = vunpack.c.l.b16 %v1730
    %v1806 = vunpack.c.h.b16 %v1730
    %v1807 = vunpack.c.l.b16 %v1731
    %v1808 = vunpack.c.h.b16 %v1731
    %v1809 = vunpack.c.l.b16 %v1732
    %v1810 = vunpack.c.h.b16 %v1732
    %v1811 = vunpack.c.l.b16 %v1733
    %v1812 = vunpack.c.h.b16 %v1733
    %v1813 = vunpack.c.l.b16 %v1734
    %v1814 = vunpack.c.h.b16 %v1734
    %v1815 = vunpack.c.l.b16 %v1735
    %v1816 = vunpack.c.h.b16 %v1735
    %v1817 = vunpack.c.l.b16 %v1736
    %v1818 = vunpack.c.h.b16 %v1736
    %v1819 = vunpack.c.l.b16 %v1737
    %v1820 = vunpack.c.h.b16 %v1737
    %v1821 = vunpack.c.l.b16 %v1738
    %v1822 = vunpack.c.h.b16 %v1738
    %v1823 = vunpack.c.l.b16 %v1739
    %v1824 = vunpack.c.h.b16 %v1739
    %v1825 = vunpack.c.l.b16 %v1740
    %v1826 = vunpack.c.h.b16 %v1740
    %v1827 = vunpack.c.l.b16 %v1741
    %v1828 = vunpack.c.h.b16 %v1741
    %v1829 = vunpack.c.l.b16 %v1742
    %v1830 = vunpack.c.h.b16 %v1742
    %v1831 = vunpack.c.l.b16 %v1743
    %v1832 = vunpack.c.h.b16 %v1743
    %v1833 = vunpack.c.l.b16 %v1744
    %v1834 = vunpack.c.h.b16 %v1744
    %v1835 = vunpack.c.l.b16 %v1745
    %v1836 = vunpack.c.h.b16 %v1745
    %v1837 = vunpack.c.l.b16 %v1746
    %v1838 = vunpack.c.h.b16 %v1746
    %v1839 = vunpack.c.l.b16 %v1747
    %v1840 = vunpack.c.h.b16 %v1747
    %v1841 = vunpack.c.l.b16 %v1748
    %v1842 = vunpack.c.h.b16 %v1748
    %v1843 = vunpack.c.l.b16 %v1749
    %v1844 = vunpack.c.h.b16 %v1749
    %v1845 = vunpack.c.l.b16 %v1750
    %v1846 = vunpack.c.h.b16 %v1750
    %v1847 = vunpack.c.l.b16 %v1751
    %v1848 = vunpack.c.h.b16 %v1751
    %v1849 = vunpack.c.l.b16 %v1752
    %v1850 = vunpack.c.h.b16 %v1752
    %v1851 = vunpack.c.l.b16 %v1753
    %v1852 = vunpack.c.h.b16 %v1753
    %v1853 = vunpack.c.l.b16 %v1754
    %v1854 = vunpack.c.h.b16 %v1754
    %v1855 = vunpack.c.l.b16 %v1755
    %v1856 = vunpack.c.h.b16 %v1755
    %v1857 = vunpack.c.l.b16 %v1756
    %v1858 = vunpack.c.h.b16 %v1756
    %v1859 = vunpack.c.l.b16 %v1757
    %v1860 = vunpack.c.h.b16 %v1757
    %v1861 = vunpack.c.l.b16 %v1758
    %v1862 = vunpack.c.h.b16 %v1758
    %v1863 = vpack.c.b16 %v1803, %v1799
    %v1864 = vpack.c.b16 %v1804, %v1800
    %v1865 = vpack.c.b16 %v1805, %v1801
    %v1866 = vpack.c.b16 %v1806, %v1802
    %v1867 = vpack.c.b16 %v1811, %v1807
    %v1868 = vpack.c.b16 %v1812, %v1808
    %v1869 = vpack.c.b16 %v1813, %v1809
    %v1870 = vpack.c.b16 %v1814, %v1810
    %v1871 = vpack.c.b16 %v1819, %v1815
    %v1872 = vpack.c.b16 %v1820, %v1816
    %v1873 = vpack.c.b16 %v1821, %v1817
    %v1874 = vpack.c.b16 %v1822, %v1818
    %v1875 = vpack.c.b16 %v1827, %v1823
    %v1876 = vpack.c.b16 %v1828, %v1824
    %v1877 = vpack.c.b16 %v1829, %v1825
    %v1878 = vpack.c.b16 %v1830, %v1826
    %v1879 = vpack.c.b16 %v1835, %v1831
    %v1880 = vpack.c.b16 %v1836, %v1832
    %v1881 = vpack.c.b16 %v1837, %v1833
    %v1882 = vpack.c.b16 %v1838, %v1834
    %v1883 = vpack.c.b16 %v1843, %v1839
    %v1884 = vpack.c.b16 %v1844, %v1840
    %v1885 = vpack.c.b16 %v1845, %v1841
    %v1886 = vpack.c.b16 %v1846, %v1842
    %v1887 = vpack.c.b16 %v1851, %v1847
    %v1888 = vpack.c.b16 %v1852, %v1848
    %v1889 = vpack.c.b16 %v1853, %v1849
    %v1890 = vpack.c.b16 %v1854, %v1850
    %v1891 = vpack.c.b16 %v1859, %v1855
    %v1892 = vpack.c.b16 %v1860, %v1856
    %v1893 = vpack.c.b16 %v1861, %v1857
    %v1894 = vpack.c.b16 %v1862, %v1858
    %1927 = vmatpush.bf16.msra.mxu0 %v1891
    %1928 = vmatpush.bf16.msra.mxu0 %v1887
    %1929 = vmatpush.bf16.msra.mxu0 %v1883
    %1930 = vmatpush.bf16.msra.mxu0 %v1879
    %1931 = vmatpush.bf16.msra.mxu0 %v1875
    %1932 = vmatpush.bf16.msra.mxu0 %v1871
    %1933 = vmatpush.bf16.msra.mxu0 %v1867
    %1934 = vmatpush.bf16.msra.mxu0 %v1863
    %1935 = vmatmul.bf16.gmra.mxu0 %v1765
    %v1936 = vpop.f32.mrf.mxu0
    %v1937 = vadd.f32 0.0, %v1936
    %v1938 = vpop.f32.mrf.mxu0
    %1939 = vdwg.mxu0
    %1940 = vmatpush.bf16.msra.mxu0 %v1892
    %1941 = vmatpush.bf16.msra.mxu0 %v1888
    %1942 = vmatpush.bf16.msra.mxu0 %v1884
    %1943 = vmatpush.bf16.msra.mxu0 %v1880
    %1944 = vmatpush.bf16.msra.mxu0 %v1876
    %1945 = vmatpush.bf16.msra.mxu0 %v1872
    %1946 = vmatpush.bf16.msra.mxu0 %v1868
    %1947 = vmatpush.bf16.msra.mxu0 %v1864
    %1948 = vmatmul.bf16.gmra.mxu0 %v1765
    %v1949 = vpop.f32.mrf.mxu0
    %v1950 = vadd.f32 0.0, %v1949
    %v1951 = vpop.f32.mrf.mxu0
    %1952 = vdwg.mxu0
    %1953 = vmatpush.bf16.msra.mxu0 %v1893
    %1954 = vmatpush.bf16.msra.mxu0 %v1889
    %1955 = vmatpush.bf16.msra.mxu0 %v1885
    %1956 = vmatpush.bf16.msra.mxu0 %v1881
    %1957 = vmatpush.bf16.msra.mxu0 %v1877
    %1958 = vmatpush.bf16.msra.mxu0 %v1873
    %1959 = vmatpush.bf16.msra.mxu0 %v1869
    %1960 = vmatpush.bf16.msra.mxu0 %v1865
    %1961 = vmatmul.bf16.gmra.mxu0 %v1765
    %v1962 = vpop.f32.mrf.mxu0
    %v1963 = vadd.f32 0.0, %v1962
    %v1964 = vpop.f32.mrf.mxu0
    %1965 = vdwg.mxu0
    %1966 = vmatpush.bf16.msra.mxu0 %v1894
    %1967 = vmatpush.bf16.msra.mxu0 %v1890
    %1968 = vmatpush.bf16.msra.mxu0 %v1886
    %1969 = vmatpush.bf16.msra.mxu0 %v1882
    %1970 = vmatpush.bf16.msra.mxu0 %v1878
    %1971 = vmatpush.bf16.msra.mxu0 %v1874
    %1972 = vmatpush.bf16.msra.mxu0 %v1870
    %1973 = vmatpush.bf16.msra.mxu0 %v1866
    %1974 = vmatmul.bf16.gmra.mxu0 %v1765
    %v1975 = vpop.f32.mrf.mxu0
    %v1976 = vadd.f32 0.0, %v1975
    %v1977 = vpop.f32.mrf.mxu0
    %1978 = vdwg.mxu0
    %v1979 = vadd.f32 %v1682, %v1937
    %v1980 = vadd.f32 %v1695, %v1950
    %v1981 = vadd.f32 %v1708, %v1963
    %v1982 = vadd.f32 %v1721, %v1976
    %s1983 = scalar_lea.vmem [#allocation2], 768
    %v1984 = vld [vmem:[%s1983] sm:$0xff]
    %v1985 = vld [vmem:[%s1983 + $0x8] sm:$0xff]
    %v1986 = vld [vmem:[%s1983 + $0x10] sm:$0xff]
    %v1987 = vld [vmem:[%s1983 + $0x18] sm:$0xff]
    %v1988 = vld [vmem:[%s1983 + $0x20] sm:$0xff]
    %v1989 = vld [vmem:[%s1983 + $0x28] sm:$0xff]
    %v1990 = vld [vmem:[%s1983 + $0x30] sm:$0xff]
    %v1991 = vld [vmem:[%s1983 + $0x38] sm:$0xff]
    %v1992 = vld [vmem:[%s1983 + $0x40] sm:$0xff]
    %v1993 = vld [vmem:[%s1983 + $0x48] sm:$0xff]
    %v1994 = vld [vmem:[%s1983 + $0x50] sm:$0xff]
    %v1995 = vld [vmem:[%s1983 + $0x58] sm:$0xff]
    %v1996 = vld [vmem:[%s1983 + $0x60] sm:$0xff]
    %v1997 = vld [vmem:[%s1983 + $0x68] sm:$0xff]
    %v1998 = vld [vmem:[%s1983 + $0x70] sm:$0xff]
    %v1999 = vld [vmem:[%s1983 + $0x78] sm:$0xff]
    %v2000 = vld [vmem:[%s1983 + $0x80] sm:$0xff]
    %v2001 = vld [vmem:[%s1983 + $0x88] sm:$0xff]
    %v2002 = vld [vmem:[%s1983 + $0x90] sm:$0xff]
    %v2003 = vld [vmem:[%s1983 + $0x98] sm:$0xff]
    %v2004 = vld [vmem:[%s1983 + $0xa0] sm:$0xff]
    %v2005 = vld [vmem:[%s1983 + $0xa8] sm:$0xff]
    %v2006 = vld [vmem:[%s1983 + $0xb0] sm:$0xff]
    %v2007 = vld [vmem:[%s1983 + $0xb8] sm:$0xff]
    %v2008 = vld [vmem:[%s1983 + $0xc0] sm:$0xff]
    %v2009 = vld [vmem:[%s1983 + $0xc8] sm:$0xff]
    %v2010 = vld [vmem:[%s1983 + $0xd0] sm:$0xff]
    %v2011 = vld [vmem:[%s1983 + $0xd8] sm:$0xff]
    %v2012 = vld [vmem:[%s1983 + $0xe0] sm:$0xff]
    %v2013 = vld [vmem:[%s1983 + $0xe8] sm:$0xff]
    %v2014 = vld [vmem:[%s1983 + $0xf0] sm:$0xff]
    %v2015 = vld [vmem:[%s1983 + $0xf8] sm:$0xff]
    %v2016 = vrot.slane %v1761, 4
    %v2017 = vrot.slane %v1762, 3
    %v2018 = vsel %vm1292, %v2017, %v2016
    %v2019 = vpack.c.b16 %v2018, %v2018
    %v2053 = vunpack.c.l.b16 %v1984
    %v2054 = vunpack.c.h.b16 %v1984
    %v2055 = vunpack.c.l.b16 %v1985
    %v2056 = vunpack.c.h.b16 %v1985
    %v2057 = vunpack.c.l.b16 %v1986
    %v2058 = vunpack.c.h.b16 %v1986
    %v2059 = vunpack.c.l.b16 %v1987
    %v2060 = vunpack.c.h.b16 %v1987
    %v2061 = vunpack.c.l.b16 %v1988
    %v2062 = vunpack.c.h.b16 %v1988
    %v2063 = vunpack.c.l.b16 %v1989
    %v2064 = vunpack.c.h.b16 %v1989
    %v2065 = vunpack.c.l.b16 %v1990
    %v2066 = vunpack.c.h.b16 %v1990
    %v2067 = vunpack.c.l.b16 %v1991
    %v2068 = vunpack.c.h.b16 %v1991
    %v2069 = vunpack.c.l.b16 %v1992
    %v2070 = vunpack.c.h.b16 %v1992
    %v2071 = vunpack.c.l.b16 %v1993
    %v2072 = vunpack.c.h.b16 %v1993
    %v2073 = vunpack.c.l.b16 %v1994
    %v2074 = vunpack.c.h.b16 %v1994
    %v2075 = vunpack.c.l.b16 %v1995
    %v2076 = vunpack.c.h.b16 %v1995
    %v2077 = vunpack.c.l.b16 %v1996
    %v2078 = vunpack.c.h.b16 %v1996
    %v2079 = vunpack.c.l.b16 %v1997
    %v2080 = vunpack.c.h.b16 %v1997
    %v2081 = vunpack.c.l.b16 %v1998
    %v2082 = vunpack.c.h.b16 %v1998
    %v2083 = vunpack.c.l.b16 %v1999
    %v2084 = vunpack.c.h.b16 %v1999
    %v2085 = vunpack.c.l.b16 %v2000
    %v2086 = vunpack.c.h.b16 %v2000
    %v2087 = vunpack.c.l.b16 %v2001
    %v2088 = vunpack.c.h.b16 %v2001
    %v2089 = vunpack.c.l.b16 %v2002
    %v2090 = vunpack.c.h.b16 %v2002
    %v2091 = vunpack.c.l.b16 %v2003
    %v2092 = vunpack.c.h.b16 %v2003
    %v2093 = vunpack.c.l.b16 %v2004
    %v2094 = vunpack.c.h.b16 %v2004
    %v2095 = vunpack.c.l.b16 %v2005
    %v2096 = vunpack.c.h.b16 %v2005
    %v2097 = vunpack.c.l.b16 %v2006
    %v2098 = vunpack.c.h.b16 %v2006
    %v2099 = vunpack.c.l.b16 %v2007
    %v2100 = vunpack.c.h.b16 %v2007
    %v2101 = vunpack.c.l.b16 %v2008
    %v2102 = vunpack.c.h.b16 %v2008
    %v2103 = vunpack.c.l.b16 %v2009
    %v2104 = vunpack.c.h.b16 %v2009
    %v2105 = vunpack.c.l.b16 %v2010
    %v2106 = vunpack.c.h.b16 %v2010
    %v2107 = vunpack.c.l.b16 %v2011
    %v2108 = vunpack.c.h.b16 %v2011
    %v2109 = vunpack.c.l.b16 %v2012
    %v2110 = vunpack.c.h.b16 %v2012
    %v2111 = vunpack.c.l.b16 %v2013
    %v2112 = vunpack.c.h.b16 %v2013
    %v2113 = vunpack.c.l.b16 %v2014
    %v2114 = vunpack.c.h.b16 %v2014
    %v2115 = vunpack.c.l.b16 %v2015
    %v2116 = vunpack.c.h.b16 %v2015
    %v2117 = vpack.c.b16 %v2057, %v2053
    %v2118 = vpack.c.b16 %v2058, %v2054
    %v2119 = vpack.c.b16 %v2059, %v2055
    %v2120 = vpack.c.b16 %v2060, %v2056
    %v2121 = vpack.c.b16 %v2065, %v2061
    %v2122 = vpack.c.b16 %v2066, %v2062
    %v2123 = vpack.c.b16 %v2067, %v2063
    %v2124 = vpack.c.b16 %v2068, %v2064
    %v2125 = vpack.c.b16 %v2073, %v2069
    %v2126 = vpack.c.b16 %v2074, %v2070
    %v2127 = vpack.c.b16 %v2075, %v2071
    %v2128 = vpack.c.b16 %v2076, %v2072
    %v2129 = vpack.c.b16 %v2081, %v2077
    %v2130 = vpack.c.b16 %v2082, %v2078
    %v2131 = vpack.c.b16 %v2083, %v2079
    %v2132 = vpack.c.b16 %v2084, %v2080
    %v2133 = vpack.c.b16 %v2089, %v2085
    %v2134 = vpack.c.b16 %v2090, %v2086
    %v2135 = vpack.c.b16 %v2091, %v2087
    %v2136 = vpack.c.b16 %v2092, %v2088
    %v2137 = vpack.c.b16 %v2097, %v2093
    %v2138 = vpack.c.b16 %v2098, %v2094
    %v2139 = vpack.c.b16 %v2099, %v2095
    %v2140 = vpack.c.b16 %v2100, %v2096
    %v2141 = vpack.c.b16 %v2105, %v2101
    %v2142 = vpack.c.b16 %v2106, %v2102
    %v2143 = vpack.c.b16 %v2107, %v2103
    %v2144 = vpack.c.b16 %v2108, %v2104
    %v2145 = vpack.c.b16 %v2113, %v2109
    %v2146 = vpack.c.b16 %v2114, %v2110
    %v2147 = vpack.c.b16 %v2115, %v2111
    %v2148 = vpack.c.b16 %v2116, %v2112
    %2181 = vmatpush.bf16.msra.mxu0 %v2145
    %2182 = vmatpush.bf16.msra.mxu0 %v2141
    %2183 = vmatpush.bf16.msra.mxu0 %v2137
    %2184 = vmatpush.bf16.msra.mxu0 %v2133
    %2185 = vmatpush.bf16.msra.mxu0 %v2129
    %2186 = vmatpush.bf16.msra.mxu0 %v2125
    %2187 = vmatpush.bf16.msra.mxu0 %v2121
    %2188 = vmatpush.bf16.msra.mxu0 %v2117
    %2189 = vmatmul.bf16.gmra.mxu0 %v2019
    %v2190 = vpop.f32.mrf.mxu0
    %v2191 = vadd.f32 0.0, %v2190
    %v2192 = vpop.f32.mrf.mxu0
    %2193 = vdwg.mxu0
    %2194 = vmatpush.bf16.msra.mxu0 %v2146
    %2195 = vmatpush.bf16.msra.mxu0 %v2142
    %2196 = vmatpush.bf16.msra.mxu0 %v2138
    %2197 = vmatpush.bf16.msra.mxu0 %v2134
    %2198 = vmatpush.bf16.msra.mxu0 %v2130
    %2199 = vmatpush.bf16.msra.mxu0 %v2126
    %2200 = vmatpush.bf16.msra.mxu0 %v2122
    %2201 = vmatpush.bf16.msra.mxu0 %v2118
    %2202 = vmatmul.bf16.gmra.mxu0 %v2019
    %v2203 = vpop.f32.mrf.mxu0
    %v2204 = vadd.f32 0.0, %v2203
    %v2205 = vpop.f32.mrf.mxu0
    %2206 = vdwg.mxu0
    %2207 = vmatpush.bf16.msra.mxu0 %v2147
    %2208 = vmatpush.bf16.msra.mxu0 %v2143
    %2209 = vmatpush.bf16.msra.mxu0 %v2139
    %2210 = vmatpush.bf16.msra.mxu0 %v2135
    %2211 = vmatpush.bf16.msra.mxu0 %v2131
    %2212 = vmatpush.bf16.msra.mxu0 %v2127
    %2213 = vmatpush.bf16.msra.mxu0 %v2123
    %2214 = vmatpush.bf16.msra.mxu0 %v2119
    %2215 = vmatmul.bf16.gmra.mxu0 %v2019
    %v2216 = vpop.f32.mrf.mxu0
    %v2217 = vadd.f32 0.0, %v2216
    %v2218 = vpop.f32.mrf.mxu0
    %2219 = vdwg.mxu0
    %2220 = vmatpush.bf16.msra.mxu0 %v2148
    %2221 = vmatpush.bf16.msra.mxu0 %v2144
    %2222 = vmatpush.bf16.msra.mxu0 %v2140
    %2223 = vmatpush.bf16.msra.mxu0 %v2136
    %2224 = vmatpush.bf16.msra.mxu0 %v2132
    %2225 = vmatpush.bf16.msra.mxu0 %v2128
    %2226 = vmatpush.bf16.msra.mxu0 %v2124
    %2227 = vmatpush.bf16.msra.mxu0 %v2120
    %2228 = vmatmul.bf16.gmra.mxu0 %v2019
    %v2229 = vpop.f32.mrf.mxu0
    %v2230 = vadd.f32 0.0, %v2229
    %v2231 = vpop.f32.mrf.mxu0
    %2232 = vdwg.mxu0
    %v2233 = vadd.f32 %v1979, %v2191
    %v2234 = vadd.f32 %v1980, %v2204
    %v2235 = vadd.f32 %v1981, %v2217
    %v2236 = vadd.f32 %v1982, %v2230
    %v2237 = vpack.c.bf16 %v1210, %v1210
    %v2238 = vpack.c.bf16 %v1213, %v1213
    %s2239 = scalar_lea.vmem [#allocation2], 1024
    %v2240 = vld [vmem:[%s2239] sm:$0xff]
    %v2241 = vld [vmem:[%s2239 + $0x8] sm:$0xff]
    %v2242 = vld [vmem:[%s2239 + $0x10] sm:$0xff]
    %v2243 = vld [vmem:[%s2239 + $0x18] sm:$0xff]
    %v2244 = vld [vmem:[%s2239 + $0x20] sm:$0xff]
    %v2245 = vld [vmem:[%s2239 + $0x28] sm:$0xff]
    %v2246 = vld [vmem:[%s2239 + $0x30] sm:$0xff]
    %v2247 = vld [vmem:[%s2239 + $0x38] sm:$0xff]
    %v2248 = vld [vmem:[%s2239 + $0x40] sm:$0xff]
    %v2249 = vld [vmem:[%s2239 + $0x48] sm:$0xff]
    %v2250 = vld [vmem:[%s2239 + $0x50] sm:$0xff]
    %v2251 = vld [vmem:[%s2239 + $0x58] sm:$0xff]
    %v2252 = vld [vmem:[%s2239 + $0x60] sm:$0xff]
    %v2253 = vld [vmem:[%s2239 + $0x68] sm:$0xff]
    %v2254 = vld [vmem:[%s2239 + $0x70] sm:$0xff]
    %v2255 = vld [vmem:[%s2239 + $0x78] sm:$0xff]
    %v2256 = vld [vmem:[%s2239 + $0x80] sm:$0xff]
    %v2257 = vld [vmem:[%s2239 + $0x88] sm:$0xff]
    %v2258 = vld [vmem:[%s2239 + $0x90] sm:$0xff]
    %v2259 = vld [vmem:[%s2239 + $0x98] sm:$0xff]
    %v2260 = vld [vmem:[%s2239 + $0xa0] sm:$0xff]
    %v2261 = vld [vmem:[%s2239 + $0xa8] sm:$0xff]
    %v2262 = vld [vmem:[%s2239 + $0xb0] sm:$0xff]
    %v2263 = vld [vmem:[%s2239 + $0xb8] sm:$0xff]
    %v2264 = vld [vmem:[%s2239 + $0xc0] sm:$0xff]
    %v2265 = vld [vmem:[%s2239 + $0xc8] sm:$0xff]
    %v2266 = vld [vmem:[%s2239 + $0xd0] sm:$0xff]
    %v2267 = vld [vmem:[%s2239 + $0xd8] sm:$0xff]
    %v2268 = vld [vmem:[%s2239 + $0xe0] sm:$0xff]
    %v2269 = vld [vmem:[%s2239 + $0xe8] sm:$0xff]
    %v2270 = vld [vmem:[%s2239 + $0xf0] sm:$0xff]
    %v2271 = vld [vmem:[%s2239 + $0xf8] sm:$0xff]
    %v2274 = vunpack.c.l.b16 %v2237
    %v2275 = vunpack.c.l.b16 %v2238
    %v2276 = vrot.slane %v2275, 7
    %v2277 = vsel %vm1292, %v2276, %v2274
    %v2278 = vpack.c.b16 %v2277, %v2277
    %v2312 = vunpack.c.l.b16 %v2240
    %v2313 = vunpack.c.h.b16 %v2240
    %v2314 = vunpack.c.l.b16 %v2241
    %v2315 = vunpack.c.h.b16 %v2241
    %v2316 = vunpack.c.l.b16 %v2242
    %v2317 = vunpack.c.h.b16 %v2242
    %v2318 = vunpack.c.l.b16 %v2243
    %v2319 = vunpack.c.h.b16 %v2243
    %v2320 = vunpack.c.l.b16 %v2244
    %v2321 = vunpack.c.h.b16 %v2244
    %v2322 = vunpack.c.l.b16 %v2245
    %v2323 = vunpack.c.h.b16 %v2245
    %v2324 = vunpack.c.l.b16 %v2246
    %v2325 = vunpack.c.h.b16 %v2246
    %v2326 = vunpack.c.l.b16 %v2247
    %v2327 = vunpack.c.h.b16 %v2247
    %v2328 = vunpack.c.l.b16 %v2248
    %v2329 = vunpack.c.h.b16 %v2248
    %v2330 = vunpack.c.l.b16 %v2249
    %v2331 = vunpack.c.h.b16 %v2249
    %v2332 = vunpack.c.l.b16 %v2250
    %v2333 = vunpack.c.h.b16 %v2250
    %v2334 = vunpack.c.l.b16 %v2251
    %v2335 = vunpack.c.h.b16 %v2251
    %v2336 = vunpack.c.l.b16 %v2252
    %v2337 = vunpack.c.h.b16 %v2252
    %v2338 = vunpack.c.l.b16 %v2253
    %v2339 = vunpack.c.h.b16 %v2253
    %v2340 = vunpack.c.l.b16 %v2254
    %v2341 = vunpack.c.h.b16 %v2254
    %v2342 = vunpack.c.l.b16 %v2255
    %v2343 = vunpack.c.h.b16 %v2255
    %v2344 = vunpack.c.l.b16 %v2256
    %v2345 = vunpack.c.h.b16 %v2256
    %v2346 = vunpack.c.l.b16 %v2257
    %v2347 = vunpack.c.h.b16 %v2257
    %v2348 = vunpack.c.l.b16 %v2258
    %v2349 = vunpack.c.h.b16 %v2258
    %v2350 = vunpack.c.l.b16 %v2259
    %v2351 = vunpack.c.h.b16 %v2259
    %v2352 = vunpack.c.l.b16 %v2260
    %v2353 = vunpack.c.h.b16 %v2260
    %v2354 = vunpack.c.l.b16 %v2261
    %v2355 = vunpack.c.h.b16 %v2261
    %v2356 = vunpack.c.l.b16 %v2262
    %v2357 = vunpack.c.h.b16 %v2262
    %v2358 = vunpack.c.l.b16 %v2263
    %v2359 = vunpack.c.h.b16 %v2263
    %v2360 = vunpack.c.l.b16 %v2264
    %v2361 = vunpack.c.h.b16 %v2264
    %v2362 = vunpack.c.l.b16 %v2265
    %v2363 = vunpack.c.h.b16 %v2265
    %v2364 = vunpack.c.l.b16 %v2266
    %v2365 = vunpack.c.h.b16 %v2266
    %v2366 = vunpack.c.l.b16 %v2267
    %v2367 = vunpack.c.h.b16 %v2267
    %v2368 = vunpack.c.l.b16 %v2268
    %v2369 = vunpack.c.h.b16 %v2268
    %v2370 = vunpack.c.l.b16 %v2269
    %v2371 = vunpack.c.h.b16 %v2269
    %v2372 = vunpack.c.l.b16 %v2270
    %v2373 = vunpack.c.h.b16 %v2270
    %v2374 = vunpack.c.l.b16 %v2271
    %v2375 = vunpack.c.h.b16 %v2271
    %v2376 = vpack.c.b16 %v2316, %v2312
    %v2377 = vpack.c.b16 %v2317, %v2313
    %v2378 = vpack.c.b16 %v2318, %v2314
    %v2379 = vpack.c.b16 %v2319, %v2315
    %v2380 = vpack.c.b16 %v2324, %v2320
    %v2381 = vpack.c.b16 %v2325, %v2321
    %v2382 = vpack.c.b16 %v2326, %v2322
    %v2383 = vpack.c.b16 %v2327, %v2323
    %v2384 = vpack.c.b16 %v2332, %v2328
    %v2385 = vpack.c.b16 %v2333, %v2329
    %v2386 = vpack.c.b16 %v2334, %v2330
    %v2387 = vpack.c.b16 %v2335, %v2331
    %v2388 = vpack.c.b16 %v2340, %v2336
    %v2389 = vpack.c.b16 %v2341, %v2337
    %v2390 = vpack.c.b16 %v2342, %v2338
    %v2391 = vpack.c.b16 %v2343, %v2339
    %v2392 = vpack.c.b16 %v2348, %v2344
    %v2393 = vpack.c.b16 %v2349, %v2345
    %v2394 = vpack.c.b16 %v2350, %v2346
    %v2395 = vpack.c.b16 %v2351, %v2347
    %v2396 = vpack.c.b16 %v2356, %v2352
    %v2397 = vpack.c.b16 %v2357, %v2353
    %v2398 = vpack.c.b16 %v2358, %v2354
    %v2399 = vpack.c.b16 %v2359, %v2355
    %v2400 = vpack.c.b16 %v2364, %v2360
    %v2401 = vpack.c.b16 %v2365, %v2361
    %v2402 = vpack.c.b16 %v2366, %v2362
    %v2403 = vpack.c.b16 %v2367, %v2363
    %v2404 = vpack.c.b16 %v2372, %v2368
    %v2405 = vpack.c.b16 %v2373, %v2369
    %v2406 = vpack.c.b16 %v2374, %v2370
    %v2407 = vpack.c.b16 %v2375, %v2371
    %2440 = vmatpush.bf16.msra.mxu0 %v2404
    %2441 = vmatpush.bf16.msra.mxu0 %v2400
    %2442 = vmatpush.bf16.msra.mxu0 %v2396
    %2443 = vmatpush.bf16.msra.mxu0 %v2392
    %2444 = vmatpush.bf16.msra.mxu0 %v2388
    %2445 = vmatpush.bf16.msra.mxu0 %v2384
    %2446 = vmatpush.bf16.msra.mxu0 %v2380
    %2447 = vmatpush.bf16.msra.mxu0 %v2376
    %2448 = vmatmul.bf16.gmra.mxu0 %v2278
    %v2449 = vpop.f32.mrf.mxu0
    %v2450 = vadd.f32 0.0, %v2449
    %v2451 = vpop.f32.mrf.mxu0
    %2452 = vdwg.mxu0
    %2453 = vmatpush.bf16.msra.mxu0 %v2405
    %2454 = vmatpush.bf16.msra.mxu0 %v2401
    %2455 = vmatpush.bf16.msra.mxu0 %v2397
    %2456 = vmatpush.bf16.msra.mxu0 %v2393
    %2457 = vmatpush.bf16.msra.mxu0 %v2389
    %2458 = vmatpush.bf16.msra.mxu0 %v2385
    %2459 = vmatpush.bf16.msra.mxu0 %v2381
    %2460 = vmatpush.bf16.msra.mxu0 %v2377
    %2461 = vmatmul.bf16.gmra.mxu0 %v2278
    %v2462 = vpop.f32.mrf.mxu0
    %v2463 = vadd.f32 0.0, %v2462
    %v2464 = vpop.f32.mrf.mxu0
    %2465 = vdwg.mxu0
    %2466 = vmatpush.bf16.msra.mxu0 %v2406
    %2467 = vmatpush.bf16.msra.mxu0 %v2402
    %2468 = vmatpush.bf16.msra.mxu0 %v2398
    %2469 = vmatpush.bf16.msra.mxu0 %v2394
    %2470 = vmatpush.bf16.msra.mxu0 %v2390
    %2471 = vmatpush.bf16.msra.mxu0 %v2386
    %2472 = vmatpush.bf16.msra.mxu0 %v2382
    %2473 = vmatpush.bf16.msra.mxu0 %v2378
    %2474 = vmatmul.bf16.gmra.mxu0 %v2278
    %v2475 = vpop.f32.mrf.mxu0
    %v2476 = vadd.f32 0.0, %v2475
    %v2477 = vpop.f32.mrf.mxu0
    %2478 = vdwg.mxu0
    %2479 = vmatpush.bf16.msra.mxu0 %v2407
    %2480 = vmatpush.bf16.msra.mxu0 %v2403
    %2481 = vmatpush.bf16.msra.mxu0 %v2399
    %2482 = vmatpush.bf16.msra.mxu0 %v2395
    %2483 = vmatpush.bf16.msra.mxu0 %v2391
    %2484 = vmatpush.bf16.msra.mxu0 %v2387
    %2485 = vmatpush.bf16.msra.mxu0 %v2383
    %2486 = vmatpush.bf16.msra.mxu0 %v2379
    %2487 = vmatmul.bf16.gmra.mxu0 %v2278
    %v2488 = vpop.f32.mrf.mxu0
    %v2489 = vadd.f32 0.0, %v2488
    %v2490 = vpop.f32.mrf.mxu0
    %2491 = vdwg.mxu0
    %v2492 = vadd.f32 %v2233, %v2450
    %v2493 = vadd.f32 %v2234, %v2463
    %v2494 = vadd.f32 %v2235, %v2476
    %v2495 = vadd.f32 %v2236, %v2489
    %v2496 = vld [vmem:[%s4] sm:$0xf]
    %v2498 = vperm.slane %v2496, 0
    %v2499 = vperm.slane %v2496, 1
    %v2500 = vperm.slane %v2496, 2
    %v2501 = vperm.slane %v2496, 3
    %v2506 = vadd.f32 %v2492, %v2498
    %v2507 = vadd.f32 %v2493, %v2499
    %v2508 = vadd.f32 %v2494, %v2500
    %v2509 = vadd.f32 %v2495, %v2501
    %v2510 = vmax.f32 %v2506, 0.0
    %v2511 = vmax.f32 %v2507, 0.0
    %v2512 = vmax.f32 %v2508, 0.0
    %v2513 = vmax.f32 %v2509, 0.0
    %v2514 = vpack.c.bf16 %v2510, %v2510
    %v2515 = vpack.c.bf16 %v2511, %v2511
    %v2516 = vpack.c.bf16 %v2512, %v2512
    %v2517 = vpack.c.bf16 %v2513, %v2513
    %v2518 = vld [vmem:[%s5] sm:$0xf]
    %v2519 = vld [vmem:[%s5 + $0x4] sm:$0xf]
    %v2520 = vld [vmem:[%s5 + $0x8] sm:$0xf]
    %v2521 = vld [vmem:[%s5 + $0xc] sm:$0xf]
    %v2522 = vld [vmem:[%s5 + $0x10] sm:$0xf]
    %v2523 = vld [vmem:[%s5 + $0x14] sm:$0xf]
    %v2524 = vld [vmem:[%s5 + $0x18] sm:$0xf]
    %v2525 = vld [vmem:[%s5 + $0x1c] sm:$0xf]
    %v2526 = vld [vmem:[%s5 + $0x20] sm:$0xf]
    %v2527 = vld [vmem:[%s5 + $0x24] sm:$0xf]
    %v2528 = vld [vmem:[%s5 + $0x28] sm:$0xf]
    %v2529 = vld [vmem:[%s5 + $0x2c] sm:$0xf]
    %v2530 = vld [vmem:[%s5 + $0x30] sm:$0xf]
    %v2531 = vld [vmem:[%s5 + $0x34] sm:$0xf]
    %v2532 = vld [vmem:[%s5 + $0x38] sm:$0xf]
    %v2533 = vld [vmem:[%s5 + $0x3c] sm:$0xf]
    %v2534 = vld [vmem:[%s5 + $0x40] sm:$0xf]
    %v2535 = vld [vmem:[%s5 + $0x44] sm:$0xf]
    %v2536 = vld [vmem:[%s5 + $0x48] sm:$0xf]
    %v2537 = vld [vmem:[%s5 + $0x4c] sm:$0xf]
    %v2538 = vld [vmem:[%s5 + $0x50] sm:$0xf]
    %v2539 = vld [vmem:[%s5 + $0x54] sm:$0xf]
    %v2540 = vld [vmem:[%s5 + $0x58] sm:$0xf]
    %v2541 = vld [vmem:[%s5 + $0x5c] sm:$0xf]
    %v2542 = vld [vmem:[%s5 + $0x60] sm:$0xf]
    %v2543 = vld [vmem:[%s5 + $0x64] sm:$0xf]
    %v2544 = vld [vmem:[%s5 + $0x68] sm:$0xf]
    %v2545 = vld [vmem:[%s5 + $0x6c] sm:$0xf]
    %v2546 = vld [vmem:[%s5 + $0x70] sm:$0xf]
    %v2547 = vld [vmem:[%s5 + $0x74] sm:$0xf]
    %v2548 = vld [vmem:[%s5 + $0x78] sm:$0xf]
    %v2549 = vld [vmem:[%s5 + $0x7c] sm:$0xf]
    %v2550 = vld [vmem:[%s5 + $0x80] sm:$0xf]
    %v2551 = vld [vmem:[%s5 + $0x84] sm:$0xf]
    %v2552 = vld [vmem:[%s5 + $0x88] sm:$0xf]
    %v2553 = vld [vmem:[%s5 + $0x8c] sm:$0xf]
    %v2554 = vld [vmem:[%s5 + $0x90] sm:$0xf]
    %v2555 = vld [vmem:[%s5 + $0x94] sm:$0xf]
    %v2556 = vld [vmem:[%s5 + $0x98] sm:$0xf]
    %v2557 = vld [vmem:[%s5 + $0x9c] sm:$0xf]
    %v2558 = vld [vmem:[%s5 + $0xa0] sm:$0xf]
    %v2559 = vld [vmem:[%s5 + $0xa4] sm:$0xf]
    %v2560 = vld [vmem:[%s5 + $0xa8] sm:$0xf]
    %v2561 = vld [vmem:[%s5 + $0xac] sm:$0xf]
    %v2562 = vld [vmem:[%s5 + $0xb0] sm:$0xf]
    %v2563 = vld [vmem:[%s5 + $0xb4] sm:$0xf]
    %v2564 = vld [vmem:[%s5 + $0xb8] sm:$0xf]
    %v2565 = vld [vmem:[%s5 + $0xbc] sm:$0xf]
    %v2566 = vld [vmem:[%s5 + $0xc0] sm:$0xf]
    %v2567 = vld [vmem:[%s5 + $0xc4] sm:$0xf]
    %v2568 = vld [vmem:[%s5 + $0xc8] sm:$0xf]
    %v2569 = vld [vmem:[%s5 + $0xcc] sm:$0xf]
    %v2570 = vld [vmem:[%s5 + $0xd0] sm:$0xf]
    %v2571 = vld [vmem:[%s5 + $0xd4] sm:$0xf]
    %v2572 = vld [vmem:[%s5 + $0xd8] sm:$0xf]
    %v2573 = vld [vmem:[%s5 + $0xdc] sm:$0xf]
    %v2574 = vld [vmem:[%s5 + $0xe0] sm:$0xf]
    %v2575 = vld [vmem:[%s5 + $0xe4] sm:$0xf]
    %v2576 = vld [vmem:[%s5 + $0xe8] sm:$0xf]
    %v2577 = vld [vmem:[%s5 + $0xec] sm:$0xf]
    %v2578 = vld [vmem:[%s5 + $0xf0] sm:$0xf]
    %v2579 = vld [vmem:[%s5 + $0xf4] sm:$0xf]
    %v2580 = vld [vmem:[%s5 + $0xf8] sm:$0xf]
    %v2581 = vld [vmem:[%s5 + $0xfc] sm:$0xf]
    %v2582 = vld [vmem:[%s6] sm:$0x1]
    %v2584 = vperm.slane %v2582, 0
    %v2650 = vunpack.c.l.b16 %v2518
    %v2651 = vunpack.c.l.b16 %v2519
    %v2652 = vunpack.c.l.b16 %v2520
    %v2653 = vunpack.c.l.b16 %v2521
    %v2654 = vunpack.c.l.b16 %v2522
    %v2655 = vunpack.c.l.b16 %v2523
    %v2656 = vunpack.c.l.b16 %v2524
    %v2657 = vunpack.c.l.b16 %v2525
    %v2658 = vunpack.c.l.b16 %v2526
    %v2659 = vunpack.c.l.b16 %v2527
    %v2660 = vunpack.c.l.b16 %v2528
    %v2661 = vunpack.c.l.b16 %v2529
    %v2662 = vunpack.c.l.b16 %v2530
    %v2663 = vunpack.c.l.b16 %v2531
    %v2664 = vunpack.c.l.b16 %v2532
    %v2665 = vunpack.c.l.b16 %v2533
    %v2666 = vunpack.c.l.b16 %v2534
    %v2667 = vunpack.c.l.b16 %v2535
    %v2668 = vunpack.c.l.b16 %v2536
    %v2669 = vunpack.c.l.b16 %v2537
    %v2670 = vunpack.c.l.b16 %v2538
    %v2671 = vunpack.c.l.b16 %v2539
    %v2672 = vunpack.c.l.b16 %v2540
    %v2673 = vunpack.c.l.b16 %v2541
    %v2674 = vunpack.c.l.b16 %v2542
    %v2675 = vunpack.c.l.b16 %v2543
    %v2676 = vunpack.c.l.b16 %v2544
    %v2677 = vunpack.c.l.b16 %v2545
    %v2678 = vunpack.c.l.b16 %v2546
    %v2679 = vunpack.c.l.b16 %v2547
    %v2680 = vunpack.c.l.b16 %v2548
    %v2681 = vunpack.c.l.b16 %v2549
    %v2682 = vunpack.c.l.b16 %v2550
    %v2683 = vunpack.c.l.b16 %v2551
    %v2684 = vunpack.c.l.b16 %v2552
    %v2685 = vunpack.c.l.b16 %v2553
    %v2686 = vunpack.c.l.b16 %v2554
    %v2687 = vunpack.c.l.b16 %v2555
    %v2688 = vunpack.c.l.b16 %v2556
    %v2689 = vunpack.c.l.b16 %v2557
    %v2690 = vunpack.c.l.b16 %v2558
    %v2691 = vunpack.c.l.b16 %v2559
    %v2692 = vunpack.c.l.b16 %v2560
    %v2693 = vunpack.c.l.b16 %v2561
    %v2694 = vunpack.c.l.b16 %v2562
    %v2695 = vunpack.c.l.b16 %v2563
    %v2696 = vunpack.c.l.b16 %v2564
    %v2697 = vunpack.c.l.b16 %v2565
    %v2698 = vunpack.c.l.b16 %v2566
    %v2699 = vunpack.c.l.b16 %v2567
    %v2700 = vunpack.c.l.b16 %v2568
    %v2701 = vunpack.c.l.b16 %v2569
    %v2702 = vunpack.c.l.b16 %v2570
    %v2703 = vunpack.c.l.b16 %v2571
    %v2704 = vunpack.c.l.b16 %v2572
    %v2705 = vunpack.c.l.b16 %v2573
    %v2706 = vunpack.c.l.b16 %v2574
    %v2707 = vunpack.c.l.b16 %v2575
    %v2708 = vunpack.c.l.b16 %v2576
    %v2709 = vunpack.c.l.b16 %v2577
    %v2710 = vunpack.c.l.b16 %v2578
    %v2711 = vunpack.c.l.b16 %v2579
    %v2712 = vunpack.c.l.b16 %v2580
    %v2713 = vunpack.c.l.b16 %v2581
    %v2714 = vpack.c.b16 %v2651, %v2650
    %v2715 = vpack.c.b16 %v2653, %v2652
    %v2716 = vpack.c.b16 %v2655, %v2654
    %v2717 = vpack.c.b16 %v2657, %v2656
    %v2718 = vpack.c.b16 %v2659, %v2658
    %v2719 = vpack.c.b16 %v2661, %v2660
    %v2720 = vpack.c.b16 %v2663, %v2662
    %v2721 = vpack.c.b16 %v2665, %v2664
    %v2722 = vpack.c.b16 %v2667, %v2666
    %v2723 = vpack.c.b16 %v2669, %v2668
    %v2724 = vpack.c.b16 %v2671, %v2670
    %v2725 = vpack.c.b16 %v2673, %v2672
    %v2726 = vpack.c.b16 %v2675, %v2674
    %v2727 = vpack.c.b16 %v2677, %v2676
    %v2728 = vpack.c.b16 %v2679, %v2678
    %v2729 = vpack.c.b16 %v2681, %v2680
    %v2730 = vpack.c.b16 %v2683, %v2682
    %v2731 = vpack.c.b16 %v2685, %v2684
    %v2732 = vpack.c.b16 %v2687, %v2686
    %v2733 = vpack.c.b16 %v2689, %v2688
    %v2734 = vpack.c.b16 %v2691, %v2690
    %v2735 = vpack.c.b16 %v2693, %v2692
    %v2736 = vpack.c.b16 %v2695, %v2694
    %v2737 = vpack.c.b16 %v2697, %v2696
    %v2738 = vpack.c.b16 %v2699, %v2698
    %v2739 = vpack.c.b16 %v2701, %v2700
    %v2740 = vpack.c.b16 %v2703, %v2702
    %v2741 = vpack.c.b16 %v2705, %v2704
    %v2742 = vpack.c.b16 %v2707, %v2706
    %v2743 = vpack.c.b16 %v2709, %v2708
    %v2744 = vpack.c.b16 %v2711, %v2710
    %v2745 = vpack.c.b16 %v2713, %v2712
    %2778 = vmatpush.bf16.msra.mxu0 %v2721
    %2779 = vmatpush.bf16.msra.mxu0 %v2720
    %2780 = vmatpush.bf16.msra.mxu0 %v2719
    %2781 = vmatpush.bf16.msra.mxu0 %v2718
    %2782 = vmatpush.bf16.msra.mxu0 %v2717
    %2783 = vmatpush.bf16.msra.mxu0 %v2716
    %2784 = vmatpush.bf16.msra.mxu0 %v2715
    %2785 = vmatpush.bf16.msra.mxu0 %v2714
    %2786 = vmatmul.bf16.gmra.mxu0 %v2514
    %v2787 = vpop.f32.mrf.mxu0
    %v2788 = vadd.f32 %v2584, %v2787
    %v2789 = vpop.f32.mrf.mxu0
    %2790 = vdwg.mxu0
    %2791 = vmatpush.bf16.msra.mxu0 %v2729
    %2792 = vmatpush.bf16.msra.mxu0 %v2728
    %2793 = vmatpush.bf16.msra.mxu0 %v2727
    %2794 = vmatpush.bf16.msra.mxu0 %v2726
    %2795 = vmatpush.bf16.msra.mxu0 %v2725
    %2796 = vmatpush.bf16.msra.mxu0 %v2724
    %2797 = vmatpush.bf16.msra.mxu0 %v2723
    %2798 = vmatpush.bf16.msra.mxu0 %v2722
    %2799 = vmatmul.bf16.gmra.mxu0 %v2515
    %v2800 = vpop.f32.mrf.mxu0
    %v2801 = vadd.f32 %v2788, %v2800
    %v2802 = vpop.f32.mrf.mxu0
    %2803 = vdwg.mxu0
    %2804 = vmatpush.bf16.msra.mxu0 %v2737
    %2805 = vmatpush.bf16.msra.mxu0 %v2736
    %2806 = vmatpush.bf16.msra.mxu0 %v2735
    %2807 = vmatpush.bf16.msra.mxu0 %v2734
    %2808 = vmatpush.bf16.msra.mxu0 %v2733
    %2809 = vmatpush.bf16.msra.mxu0 %v2732
    %2810 = vmatpush.bf16.msra.mxu0 %v2731
    %2811 = vmatpush.bf16.msra.mxu0 %v2730
    %2812 = vmatmul.bf16.gmra.mxu0 %v2516
    %v2813 = vpop.f32.mrf.mxu0
    %v2814 = vadd.f32 %v2801, %v2813
    %v2815 = vpop.f32.mrf.mxu0
    %2816 = vdwg.mxu0
    %2817 = vmatpush.bf16.msra.mxu0 %v2745
    %2818 = vmatpush.bf16.msra.mxu0 %v2744
    %2819 = vmatpush.bf16.msra.mxu0 %v2743
    %2820 = vmatpush.bf16.msra.mxu0 %v2742
    %2821 = vmatpush.bf16.msra.mxu0 %v2741
    %2822 = vmatpush.bf16.msra.mxu0 %v2740
    %2823 = vmatpush.bf16.msra.mxu0 %v2739
    %2824 = vmatpush.bf16.msra.mxu0 %v2738
    %2825 = vmatmul.bf16.gmra.mxu0 %v2517
    %v2826 = vpop.f32.mrf.mxu0
    %v2827 = vadd.f32 %v2814, %v2826
    %v2828 = vpop.f32.mrf.mxu0
    %2829 = vdwg.mxu0
    %vm2830 = vcmask 1041408
    %v2831 = vsel %vm2830, %v2827, -inf
    %2832 = vmax.xlane.f32.xlu0 %v2831
    %v2833 = vpop.xlane.xlu0 %2832
    %v2834 = vsub.f32 %v2827, %v2833
    %v2835 = vmul.f32 %v2834, 1.442695
    %v2836 = vpow.pop %v2835
    %v2837 = vsel %vm2830, %v2836, 0.0
    %2838 = vadd.xlane.f32.xlu0 %v2837
    %v2839 = vpop.xlane.xlu0 %2838
    %v2840 = vrcp.pop %v2839
    %v2841 = vmul.f32 %v2836, %v2840
    %2842 = vst [vmem:[#allocation4] sm:$0x3] %v2841
    // Predicated region
    $region45: #{cnn_forward.1} parent=1 // pred_check
      _
    $region46: #{cnn_forward.1} parent=1 // pred_check_branch
      %2844 = sbr.rel (0) target = $region48
    $region47: #{cnn_forward.1} parent=1 // pred_region
      %2846 = vsyncadd [#allocation5], 0
      %s2848 = sshll.u32 [#allocation4], 4
      %s2849 = int_to_ptr.vmem [resolvable:$true] %s2848
      %s2850 = sshll.u32 %s7, 4
      %s2851 = int_to_ptr.hbm [resolvable:$true] %s2850
      %2853 = dma.vmem_to_hbm [thread:$0]  %s2849, 32, %s2851, [#allocation5]
    $region48: #{cnn_forward.1} parent=1 // pred_fallthru
      _
    // Predicated region
    $region49: #{cnn_forward.1} parent=1 // pred_check
      _
    $region50: #{cnn_forward.1} parent=1 // pred_check_branch
      %2855 = sbr.rel (0) target = $region52
    $region51: #{cnn_forward.1} parent=1 // pred_region
      %2857 = dma.done [#allocation5], 32
    $region52: #{cnn_forward.1} parent=1 // pred_fallthru
      _
    %2858 = vsyncpa [#allocation5], 1
  %2859 = vsyncmov [#allocation3]
  %s2860 = vpop.sfrf %2859
  %p2861 = scmp.eq.s32.totalorder %s2860, 0
  %p2862 = pneg %p2861
  %2864 = shalt.err (%p2862)

</llo_original>
